<compile_context>
chip_gen: v6e
topology: v6e:2x2x1
jax: 0.10.0
libtpu: 0.0.40
codegen_flags: <defaults>
</compile_context>

<pallas_src>
import functools

import jax
import jax.numpy as jnp
from jax.experimental import pallas as pl
from jax.experimental.pallas import tpu as pltpu

IGNORE_INDEX = 255
OHEM_THRESH = 0.7
OHEM_MIN_KEPT = 100000
DELTA_VAR = 0.5
DELTA_DIST = 1.5

# Pixel tile on the 128-lane axis. Review: sweep 2048-8192; 4096 keeps the
# double-buffered (C, TP) bf16 blocks far below the scoped-VMEM budget on every
# generation (v5e / v6e / v7x), so no per-chip cap is needed.
MAX_TP = 4096
# bf16 for the dominant HBM streams (upsampled logits / embeddings); kernels upcast.
COMPUTE_DTYPE = jnp.bfloat16
_VMEM_LIMIT = 32 * 1024 * 1024  # explicit VMEM budget (safe on v7x's 64 MiB physical)


def _round_up(x, m):
    return (x + m - 1) // m * m


def _tile_plan(p):
    """Pick the pixel tile TP and padded pixel count for a flattened H*W of size p."""
    tp = MAX_TP if p >= MAX_TP else _round_up(max(p, 128), 128)
    p_pad = _round_up(p, tp)
    return tp, p_pad, p_pad // tp


def _chunk_plan(n_tiles, max_chunks=2):
    """Split the pixel-tile reduction into parallel chunks (keeps both v7x TCs busy)."""
    for c in range(max_chunks, 0, -1):
        if n_tiles % c == 0:
            return c, n_tiles // c
    return 1, n_tiles


def _pad_last(x, p_pad, value):
    pad = p_pad - x.shape[-1]
    if pad == 0:
        return x
    widths = [(0, 0)] * (x.ndim - 1) + [(0, pad)]
    return jnp.pad(x, widths, constant_values=value)


# ----------------------------------------------------------------------------
# Pallas kernels (pixels on the lane axis, classes/embedding on sublanes)
# ----------------------------------------------------------------------------
def _ce_kernel(labels_ref, logits_ref, ce_ref, prob_ref):
    # labels: (1, 1, TP) int32; logits: (1, C, TP); outputs: (1, 1, TP) f32
    logits = logits_ref[0].astype(jnp.float32)                   # (C, TP)
    labels = labels_ref[0]                                       # (1, TP)
    cls = jax.lax.broadcasted_iota(jnp.int32, logits.shape, 0)   # (C, TP)
    onehot = jnp.where((cls == labels) & (labels != IGNORE_INDEX), 1.0, 0.0)
    m = jnp.max(logits, axis=0, keepdims=True)                   # (1, TP)
    z = logits - m
    lse = jnp.log(jnp.sum(jnp.exp(z), axis=0, keepdims=True))    # (1, TP)
    gt_lp = jnp.sum((z - lse) * onehot, axis=0, keepdims=True)   # (1, TP)
    ce_ref[0] = -gt_lp
    prob_ref[0] = jnp.exp(gt_lp)


def _cluster_sum_kernel(labels_ref, emb_ref, sums_ref, counts_ref):
    # labels: (1,1,TP) int32; emb: (1,E,TP); sums: (1,1,K,E); counts: (1,1,K,1)
    @pl.when(pl.program_id(2) == 0)
    def _():
        sums_ref[...] = jnp.zeros_like(sums_ref)
        counts_ref[...] = jnp.zeros_like(counts_ref)

    labels = labels_ref[0]                                       # (1, TP)
    e = emb_ref[0].astype(jnp.float32)                           # (E, TP)
    k = sums_ref.shape[2]
    cls = jax.lax.broadcasted_iota(jnp.int32, (k, labels.shape[1]), 0)
    oh = jnp.where((cls == labels) & (labels != IGNORE_INDEX), 1.0, 0.0)   # (K, TP)
    # per-class embedding sums: contract over the pixel (lane) axis on the MXU
    psum = jax.lax.dot_general(oh, e, (((1,), (1,)), ((), ())),
                               preferred_element_type=jnp.float32)          # (K, E)
    sums_ref[...] += psum[None, None]
    counts_ref[...] += jnp.sum(oh, axis=1, keepdims=True)[None, None]       # (K, 1)


def _variance_kernel(labels_ref, emb_ref, mu_ref, hsum_ref):
    # labels: (1,1,TP); emb: (1,E,TP); mu: (1,K,E); hsum: (1,1,K,1)
    @pl.when(pl.program_id(2) == 0)
    def _():
        hsum_ref[...] = jnp.zeros_like(hsum_ref)

    labels = labels_ref[0]                                       # (1, TP)
    e = emb_ref[0].astype(jnp.float32)                           # (E, TP)
    mu = mu_ref[0]                                               # (K, E)
    k = mu.shape[0]
    cls = jax.lax.broadcasted_iota(jnp.int32, (k, labels.shape[1]), 0)
    oh = jnp.where((cls == labels) & (labels != IGNORE_INDEX), 1.0, 0.0)   # (K, TP)
    # per-pixel own-cluster mean, gathered via the one-hot on the MXU
    mu_pix = jax.lax.dot_general(mu, oh, (((0,), (0,)), ((), ())),
                                 preferred_element_type=jnp.float32)        # (E, TP)
    diff = e - mu_pix
    d = jnp.sqrt(jnp.sum(diff * diff, axis=0, keepdims=True) + 1e-12)       # (1, TP)
    hinge = jnp.maximum(d - DELTA_VAR, 0.0) ** 2                            # (1, TP)
    hsum_ref[...] += jnp.sum(oh * hinge, axis=1, keepdims=True)[None, None]  # (K, 1)


# ----------------------------------------------------------------------------
# pallas_call wrappers
# ----------------------------------------------------------------------------
def _ce_pixelwise(labels, logits, tp):
    # labels: (N,1,Pp) int32; logits: (N,C,Pp) -> per-pixel CE and gt-prob, each (N,Pp)
    n, c, p_pad = logits.shape
    grid = (n, p_pad // tp)
    ce, prob = pl.pallas_call(
        _ce_kernel,
        out_shape=(jax.ShapeDtypeStruct((n, 1, p_pad), jnp.float32),
                   jax.ShapeDtypeStruct((n, 1, p_pad), jnp.float32)),
        grid_spec=pltpu.PrefetchScalarGridSpec(
            num_scalar_prefetch=0, grid=grid,
            in_specs=[pl.BlockSpec((1, 1, tp), lambda b, p: (b, 0, p)),
                      pl.BlockSpec((1, c, tp), lambda b, p: (b, 0, p))],
            out_specs=[pl.BlockSpec((1, 1, tp), lambda b, p: (b, 0, p)),
                       pl.BlockSpec((1, 1, tp), lambda b, p: (b, 0, p))]),
        compiler_params=pltpu.CompilerParams(
            dimension_semantics=("parallel", "parallel"),
            vmem_limit_bytes=_VMEM_LIMIT),
    )(labels, logits)
    return ce[:, 0, :], prob[:, 0, :]


def _cluster_stats(labels, emb, num_classes, tp):
    # labels: (N,1,Pp), emb: (N,E,Pp) -> per-class sums (N,K,E), counts (N,K)
    n, e, p_pad = emb.shape
    k = num_classes
    nchunks, steps = _chunk_plan(p_pad // tp)
    grid = (n, nchunks, steps)
    sums, counts = pl.pallas_call(
        _cluster_sum_kernel,
        out_shape=(jax.ShapeDtypeStruct((n, nchunks, k, e), jnp.float32),
                   jax.ShapeDtypeStruct((n, nchunks, k, 1), jnp.float32)),
        grid_spec=pltpu.PrefetchScalarGridSpec(
            num_scalar_prefetch=0, grid=grid,
            in_specs=[pl.BlockSpec((1, 1, tp), lambda b, c, p: (b, 0, c * steps + p)),
                      pl.BlockSpec((1, e, tp), lambda b, c, p: (b, 0, c * steps + p))],
            out_specs=[pl.BlockSpec((1, 1, k, e), lambda b, c, p: (b, c, 0, 0)),
                       pl.BlockSpec((1, 1, k, 1), lambda b, c, p: (b, c, 0, 0))]),
        compiler_params=pltpu.CompilerParams(
            dimension_semantics=("parallel", "parallel", "arbitrary"),
            vmem_limit_bytes=_VMEM_LIMIT),
    )(labels, emb)
    return jnp.sum(sums, axis=1), jnp.sum(counts, axis=1)[:, :, 0]


def _variance_sums(labels, emb, mu, tp):
    # per-class sum of hinge^2 distances of pixels to their own cluster mean -> (N, K)
    n, e, p_pad = emb.shape
    k = mu.shape[1]
    nchunks, steps = _chunk_plan(p_pad // tp)
    grid = (n, nchunks, steps)
    hsum = pl.pallas_call(
        _variance_kernel,
        out_shape=jax.ShapeDtypeStruct((n, nchunks, k, 1), jnp.float32),
        grid_spec=pltpu.PrefetchScalarGridSpec(
            num_scalar_prefetch=0, grid=grid,
            in_specs=[pl.BlockSpec((1, 1, tp), lambda b, c, p: (b, 0, c * steps + p)),
                      pl.BlockSpec((1, e, tp), lambda b, c, p: (b, 0, c * steps + p)),
                      pl.BlockSpec((1, k, e), lambda b, c, p: (b, 0, 0))],
            out_specs=pl.BlockSpec((1, 1, k, 1), lambda b, c, p: (b, c, 0, 0))),
        compiler_params=pltpu.CompilerParams(
            dimension_semantics=("parallel", "parallel", "arbitrary"),
            vmem_limit_bytes=_VMEM_LIMIT),
    )(labels, emb, mu)
    return jnp.sum(hsum, axis=1)[:, :, 0]


# ----------------------------------------------------------------------------
# JAX glue
# ----------------------------------------------------------------------------
def _upsample_bilinear(x, out_h, out_w):
    # Legacy F.upsample(..., mode='bilinear') semantics (align_corners=True).
    # TODO(synk): fuse this interpolation into the Pallas kernels (keep the tiny
    # low-res maps resident in VMEM) to remove the full-res HBM round trip.
    n, c, h, w = x.shape

    def coords(out_size, in_size):
        if out_size == 1 or in_size == 1:
            return jnp.zeros((out_size,), jnp.float32)
        return jnp.arange(out_size, dtype=jnp.float32) * (in_size - 1) / (out_size - 1)

    ys, xs = coords(out_h, h), coords(out_w, w)
    y0 = jnp.floor(ys).astype(jnp.int32)
    y1 = jnp.minimum(y0 + 1, h - 1)
    wy = ys - y0.astype(jnp.float32)
    x0 = jnp.floor(xs).astype(jnp.int32)
    x1 = jnp.minimum(x0 + 1, w - 1)
    wx = xs - x0.astype(jnp.float32)

    top, bot = x[:, :, y0, :], x[:, :, y1, :]
    row = top * (1.0 - wy)[None, None, :, None] + bot * wy[None, None, :, None]
    left, right = row[:, :, :, x0], row[:, :, :, x1]
    return left * (1.0 - wx) + right * wx


def _ohem_threshold(prob, valid):
    # O(P) bisection quantile replacing the O(P log P) global sort: find (to 2^-16)
    # the smallest t in [0,1] with |{valid & prob <= t}| >= min(num_valid, min_kept).
    num_valid = jnp.sum(valid.astype(jnp.int32))
    kept_target = jnp.minimum(num_valid, OHEM_MIN_KEPT)

    def body(_, lo_hi):
        lo, hi = lo_hi
        mid = 0.5 * (lo + hi)
        cnt = jnp.sum((valid & (prob <= mid)).astype(jnp.int32))
        ok = cnt >= kept_target
        return jnp.where(ok, lo, mid), jnp.where(ok, mid, hi)

    _, kth = jax.lax.fori_loop(0, 16, body, (jnp.float32(0.0), jnp.float32(1.0)))
    return jnp.maximum(kth, OHEM_THRESH)


def ohem_cross_entropy(logits_nchw, target):
    # OhemCrossEntropy2d(ignore_index=255, thresh=0.7, min_kept=100000)
    n, c, h, w = logits_nchw.shape
    p = h * w
    tp, p_pad, _ = _tile_plan(p)
    logits = _pad_last(logits_nchw.reshape(n, c, p), p_pad, 0.0).astype(COMPUTE_DTYPE)
    labels = _pad_last(target.reshape(n, 1, p).astype(jnp.int32), p_pad, IGNORE_INDEX)

    ce, prob = _ce_pixelwise(labels, logits, tp)
    ce = ce[:, :p].reshape(-1)
    prob = prob[:, :p].reshape(-1)
    valid = target.reshape(-1) != IGNORE_INDEX

    threshold = _ohem_threshold(prob, valid)
    kept = (valid & (prob <= threshold)).astype(jnp.float32)
    denom = jnp.maximum(jnp.sum(kept), 1.0)
    return jnp.sum(ce * kept) / denom


def hnm_discriminative_loss(emb_nchw, target, num_classes):
    # TODO(synk): exact hard-negative-mining rule of HNMDiscriminativeLoss is not
    # public; this implements the canonical discriminative loss (De Brabandere)
    # with delta_var=0.5, delta_dist=1.5, classes-as-instances, ignore_index=255.
    n, e, h, w = emb_nchw.shape
    k = num_classes
    p = h * w
    tp, p_pad, _ = _tile_plan(p)
    emb = _pad_last(emb_nchw.reshape(n, e, p), p_pad, 0.0).astype(COMPUTE_DTYPE)
    labels = _pad_last(target.reshape(n, 1, p).astype(jnp.int32), p_pad, IGNORE_INDEX)

    sums, counts = _cluster_stats(labels, emb, k, tp)          # (n,k,e), (n,k)
    present = counts > 0.0
    mu = sums / jnp.maximum(counts, 1.0)[..., None]            # (n,k,e)
    hsum = _variance_sums(labels, emb, mu, tp)                 # (n,k)

    n_present = jnp.maximum(jnp.sum(present.astype(jnp.float32), axis=1), 1.0)
    l_var = jnp.sum(jnp.where(present, hsum / jnp.maximum(counts, 1.0), 0.0),
                    axis=1) / n_present

    # distance term: tiny KxK pairwise hinge between cluster centres (glue)
    dist = jnp.sqrt(jnp.sum((mu[:, :, None, :] - mu[:, None, :, :]) ** 2, -1) + 1e-12)
    pair_mask = (present[:, :, None] & present[:, None, :]
                 & ~jnp.eye(k, dtype=bool)[None]).astype(jnp.float32)
    hinge = jnp.maximum(2.0 * DELTA_DIST - dist, 0.0) ** 2 * pair_mask
    n_pairs = jnp.maximum(n_present * (n_present - 1.0), 1.0)
    l_dist = jnp.sum(hinge, axis=(1, 2)) / n_pairs

    l_reg = jnp.sum(jnp.where(present, jnp.sqrt(jnp.sum(mu * mu, -1) + 1e-12), 0.0),
                    axis=1) / n_present

    return jnp.mean(l_var + l_dist + 0.001 * l_reg)


@functools.partial(jax.jit, static_argnums=(2,))
def criterion_forward(preds, target, num_classes):
    assert len(preds) == 2
    h, w = target.shape[1], target.shape[2]
    loss1 = ohem_cross_entropy(_upsample_bilinear(preds[0], h, w), target)
    loss2 = hnm_discriminative_loss(_upsample_bilinear(preds[1], h, w), target,
                                    num_classes)
    jax.debug.print("{} {}", loss1, loss2)   # mirrors the module's debug print
    return loss1 + loss2


# ----------------------------------------------------------------------------
if __name__ == "__main__":
    key = jax.random.PRNGKey(0)
    k1, k2, k3 = jax.random.split(key, 3)

    N, C, E = 2, 5, 8          # batch, num classes (pred 0), embedding dim (pred 1)
    h0, w0 = 8, 8              # low-res prediction size
    H, W = 16, 16              # target size

    pred1 = jax.random.normal(k1, (N, C, h0, w0), jnp.float32)
    pred2 = jax.random.normal(k2, (N, E, h0, w0), jnp.float32)
    target = jax.random.randint(k3, (N, H, W), 0, C).astype(jnp.int32)
    target = target.at[:, :2, :].set(IGNORE_INDEX)   # deterministic ignore band

    loss = criterion_forward((pred1, pred2), target, C)
    jax.block_until_ready(loss)
    print("KERNEL_OK")
</pallas_src>

<mosaic_0001>
module attributes {stable_mosaic.version = 11 : i64} {
  func.func @_cluster_sum_kernel(%arg0: i32, %arg1: i32, %arg2: i32, %arg3: memref<1x1x256xi32, #tpu.memory_space<vmem>>, %arg4: memref<1x8x256xbf16, #tpu.memory_space<vmem>>, %arg5: memref<1x1x5x8xf32, #tpu.memory_space<vmem>>, %arg6: memref<1x1x5x1xf32, #tpu.memory_space<vmem>>) attributes {dimension_semantics = [#tpu.dimension_semantics<parallel>, #tpu.dimension_semantics<parallel>, #tpu.dimension_semantics<arbitrary>], iteration_bounds = array<i64: 2, 1, 1>, scalar_prefetch = 0 : i64, scratch_operands = 0 : i64, tpu.core_type = #tpu.core_type<tc>, window_params = [{transform_indices = @transform_0, window_bounds = array<i64: 1, 1, 256>}, {transform_indices = @transform_1, window_bounds = array<i64: 1, 8, 256>}, {transform_indices = @transform_2, window_bounds = array<i64: 1, 1, 5, 8>}, {transform_indices = @transform_3, window_bounds = array<i64: 1, 1, 5, 1>}]} {
    %c0_i32 = arith.constant 0 : i32
    %0 = arith.cmpi eq, %arg2, %c0_i32 : i32
    %1 = arith.extui %0 : i1 to i32
    %c0_i32_0 = arith.constant 0 : i32
    %2 = arith.cmpi ne, %1, %c0_i32_0 : i32
    scf.if %2 {
      %cst_25 = arith.constant 0.000000e+00 : f32
      %29 = vector.broadcast %cst_25 : f32 to vector<1x1x5x8xf32>
      %c0_26 = arith.constant 0 : index
      %c0_27 = arith.constant 0 : index
      %c0_28 = arith.constant 0 : index
      %c0_29 = arith.constant 0 : index
      %30 = vector.load %arg5[%c0_26, %c0_27, %c0_28, %c0_29] : memref<1x1x5x8xf32, #tpu.memory_space<vmem>>, vector<1x1x5x8xf32>
      tpu.vector_store %arg5[%c0_26, %c0_27, %c0_28, %c0_29], %29 {strides = array<i32>} : memref<1x1x5x8xf32, #tpu.memory_space<vmem>>, vector<1x1x5x8xf32>,
      %cst_30 = arith.constant 0.000000e+00 : f32
      %31 = vector.broadcast %cst_30 : f32 to vector<1x1x5x1xf32>
      %c0_31 = arith.constant 0 : index
      %c0_32 = arith.constant 0 : index
      %c0_33 = arith.constant 0 : index
      %c0_34 = arith.constant 0 : index
      %32 = vector.load %arg6[%c0_31, %c0_32, %c0_33, %c0_34] : memref<1x1x5x1xf32, #tpu.memory_space<vmem>>, vector<1x1x5x1xf32>
      tpu.vector_store %arg6[%c0_31, %c0_32, %c0_33, %c0_34], %31 {strides = array<i32>} : memref<1x1x5x1xf32, #tpu.memory_space<vmem>>, vector<1x1x5x1xf32>,
    } else {
    }
    %c0 = arith.constant 0 : index
    %c0_1 = arith.constant 0 : index
    %c0_2 = arith.constant 0 : index
    %3 = vector.load %arg3[%c0, %c0_1, %c0_2] : memref<1x1x256xi32, #tpu.memory_space<vmem>>, vector<1x1x256xi32>
    %4 = vector.shape_cast %3 : vector<1x1x256xi32> to vector<1x256xi32>
    %c0_3 = arith.constant 0 : index
    %c0_4 = arith.constant 0 : index
    %c0_5 = arith.constant 0 : index
    %5 = vector.load %arg4[%c0_3, %c0_4, %c0_5] : memref<1x8x256xbf16, #tpu.memory_space<vmem>>, vector<1x8x256xbf16>
    %6 = vector.shape_cast %5 : vector<1x8x256xbf16> to vector<8x256xbf16>
    %7 = arith.extf %6 : vector<8x256xbf16> to vector<8x256xf32>
    %8 = tpu.iota {dimensions = array<i32: 0>} : vector<5x256xi32>
    %9 = vector.broadcast %4 : vector<1x256xi32> to vector<5x256xi32>
    %10 = arith.cmpi eq, %8, %9 : vector<5x256xi32>
    %c255_i32 = arith.constant 255 : i32
    %11 = vector.broadcast %c255_i32 : i32 to vector<1x256xi32>
    %12 = arith.cmpi ne, %4, %11 : vector<1x256xi32>
    %13 = vector.broadcast %12 : vector<1x256xi1> to vector<5x256xi1>
    %14 = arith.andi %10, %13 : vector<5x256xi1>
    %cst = arith.constant 1.000000e+00 : f32
    %cst_6 = arith.constant 0.000000e+00 : f32
    %15 = vector.broadcast %cst : f32 to vector<5x256xf32>
    %16 = vector.broadcast %cst_6 : f32 to vector<5x256xf32>
    %17 = arith.select %14, %15, %16 : vector<5x256xi1>, vector<5x256xf32>
    %cst_7 = arith.constant dense<0.000000e+00> : vector<5x8xf32>
    %18 = tpu.matmul %17, %7, %cst_7 {dimension_numbers = #tpu.dot_dimension_numbers<[1], [1], [0], [0], [0, 0, 1, 0], [], []>} : vector<5x256xf32>, vector<8x256xf32>, vector<5x8xf32> -> vector<5x8xf32>
    %c0_8 = arith.constant 0 : index
    %c0_9 = arith.constant 0 : index
    %c0_10 = arith.constant 0 : index
    %c0_11 = arith.constant 0 : index
    %19 = vector.load %arg5[%c0_8, %c0_9, %c0_10, %c0_11] : memref<1x1x5x8xf32, #tpu.memory_space<vmem>>, vector<1x1x5x8xf32>
    %20 = vector.shape_cast %18 : vector<5x8xf32> to vector<1x1x5x8xf32>
    %21 = arith.addf %19, %20 : vector<1x1x5x8xf32>
    %c0_12 = arith.constant 0 : index
    %c0_13 = arith.constant 0 : index
    %c0_14 = arith.constant 0 : index
    %c0_15 = arith.constant 0 : index
    %22 = vector.load %arg5[%c0_12, %c0_13, %c0_14, %c0_15] : memref<1x1x5x8xf32, #tpu.memory_space<vmem>>, vector<1x1x5x8xf32>
    tpu.vector_store %arg5[%c0_12, %c0_13, %c0_14, %c0_15], %21 {strides = array<i32>} : memref<1x1x5x8xf32, #tpu.memory_space<vmem>>, vector<1x1x5x8xf32>,
    %c0_16 = arith.constant 0 : index
    %c0_17 = arith.constant 0 : index
    %c0_18 = arith.constant 0 : index
    %c0_19 = arith.constant 0 : index
    %23 = vector.load %arg6[%c0_16, %c0_17, %c0_18, %c0_19] : memref<1x1x5x1xf32, #tpu.memory_space<vmem>>, vector<1x1x5x1xf32>
    %cst_20 = arith.constant dense<0.000000e+00> : vector<5xf32>
    %24 = vector.multi_reduction <add>, %17, %cst_20 [1] : vector<5x256xf32> to vector<5xf32>
    %25 = vector.shape_cast %24 : vector<5xf32> to vector<5x1xf32>
    %26 = vector.shape_cast %25 : vector<5x1xf32> to vector<1x1x5x1xf32>
    %27 = arith.addf %23, %26 : vector<1x1x5x1xf32>
    %c0_21 = arith.constant 0 : index
    %c0_22 = arith.constant 0 : index
    %c0_23 = arith.constant 0 : index
    %c0_24 = arith.constant 0 : index
    %28 = vector.load %arg6[%c0_21, %c0_22, %c0_23, %c0_24] : memref<1x1x5x1xf32, #tpu.memory_space<vmem>>, vector<1x1x5x1xf32>
    tpu.vector_store %arg6[%c0_21, %c0_22, %c0_23, %c0_24], %27 {strides = array<i32>} : memref<1x1x5x1xf32, #tpu.memory_space<vmem>>, vector<1x1x5x1xf32>,
    return
  }
  func.func @transform_0(%arg0: i32, %arg1: i32, %arg2: i32) -> (i32, i32, i32) {
    %c1_i32 = arith.constant 1 : i32
    %0 = arith.muli %arg1, %c1_i32 : i32
    %1 = arith.addi %0, %arg2 : i32
    %c0_i32 = arith.constant 0 : i32
    %c0_i32_0 = arith.constant 0 : i32
    return %arg0, %c0_i32, %1 : i32, i32, i32
  }
  func.func @transform_1(%arg0: i32, %arg1: i32, %arg2: i32) -> (i32, i32, i32) {
    %c1_i32 = arith.constant 1 : i32
    %0 = arith.muli %arg1, %c1_i32 : i32
    %1 = arith.addi %0, %arg2 : i32
    %c0_i32 = arith.constant 0 : i32
    %c0_i32_0 = arith.constant 0 : i32
    return %arg0, %c0_i32, %1 : i32, i32, i32
  }
  func.func @transform_2(%arg0: i32, %arg1: i32, %arg2: i32) -> (i32, i32, i32, i32) {
    %c0_i32 = arith.constant 0 : i32
    %c0_i32_0 = arith.constant 0 : i32
    %c0_i32_1 = arith.constant 0 : i32
    return %arg0, %arg1, %c0_i32, %c0_i32_0 : i32, i32, i32, i32
  }
  func.func @transform_3(%arg0: i32, %arg1: i32, %arg2: i32) -> (i32, i32, i32, i32) {
    %c0_i32 = arith.constant 0 : i32
    %c0_i32_0 = arith.constant 0 : i32
    %c0_i32_1 = arith.constant 0 : i32
    return %arg0, %arg1, %c0_i32, %c0_i32_0 : i32, i32, i32, i32
  }
}

module attributes {stable_mosaic.version = 11 : i64} {
  func.func @_variance_kernel(%arg0: i32, %arg1: i32, %arg2: i32, %arg3: memref<1x1x256xi32, #tpu.memory_space<vmem>>, %arg4: memref<1x8x256xbf16, #tpu.memory_space<vmem>>, %arg5: memref<1x5x8xf32, #tpu.memory_space<vmem>>, %arg6: memref<1x1x5x1xf32, #tpu.memory_space<vmem>>) attributes {dimension_semantics = [#tpu.dimension_semantics<parallel>, #tpu.dimension_semantics<parallel>, #tpu.dimension_semantics<arbitrary>], iteration_bounds = array<i64: 2, 1, 1>, scalar_prefetch = 0 : i64, scratch_operands = 0 : i64, tpu.core_type = #tpu.core_type<tc>, window_params = [{transform_indices = @transform_0, window_bounds = array<i64: 1, 1, 256>}, {transform_indices = @transform_1, window_bounds = array<i64: 1, 8, 256>}, {transform_indices = @transform_2, window_bounds = array<i64: 1, 5, 8>}, {transform_indices = @transform_3, window_bounds = array<i64: 1, 1, 5, 1>}]} {
    %c0_i32 = arith.constant 0 : i32
    %0 = arith.cmpi eq, %arg2, %c0_i32 : i32
    %1 = arith.extui %0 : i1 to i32
    %c0_i32_0 = arith.constant 0 : i32
    %2 = arith.cmpi ne, %1, %c0_i32_0 : i32
    scf.if %2 {
      %cst_24 = arith.constant 0.000000e+00 : f32
      %41 = vector.broadcast %cst_24 : f32 to vector<1x1x5x1xf32>
      %c0_25 = arith.constant 0 : index
      %c0_26 = arith.constant 0 : index
      %c0_27 = arith.constant 0 : index
      %c0_28 = arith.constant 0 : index
      %42 = vector.load %arg6[%c0_25, %c0_26, %c0_27, %c0_28] : memref<1x1x5x1xf32, #tpu.memory_space<vmem>>, vector<1x1x5x1xf32>
      tpu.vector_store %arg6[%c0_25, %c0_26, %c0_27, %c0_28], %41 {strides = array<i32>} : memref<1x1x5x1xf32, #tpu.memory_space<vmem>>, vector<1x1x5x1xf32>,
    } else {
    }
    %c0 = arith.constant 0 : index
    %c0_1 = arith.constant 0 : index
    %c0_2 = arith.constant 0 : index
    %3 = vector.load %arg3[%c0, %c0_1, %c0_2] : memref<1x1x256xi32, #tpu.memory_space<vmem>>, vector<1x1x256xi32>
    %4 = vector.shape_cast %3 : vector<1x1x256xi32> to vector<1x256xi32>
    %c0_3 = arith.constant 0 : index
    %c0_4 = arith.constant 0 : index
    %c0_5 = arith.constant 0 : index
    %5 = vector.load %arg4[%c0_3, %c0_4, %c0_5] : memref<1x8x256xbf16, #tpu.memory_space<vmem>>, vector<1x8x256xbf16>
    %6 = vector.shape_cast %5 : vector<1x8x256xbf16> to vector<8x256xbf16>
    %7 = arith.extf %6 : vector<8x256xbf16> to vector<8x256xf32>
    %c0_6 = arith.constant 0 : index
    %c0_7 = arith.constant 0 : index
    %c0_8 = arith.constant 0 : index
    %8 = vector.load %arg5[%c0_6, %c0_7, %c0_8] : memref<1x5x8xf32, #tpu.memory_space<vmem>>, vector<1x5x8xf32>
    %9 = vector.shape_cast %8 : vector<1x5x8xf32> to vector<5x8xf32>
    %10 = tpu.iota {dimensions = array<i32: 0>} : vector<5x256xi32>
    %11 = vector.broadcast %4 : vector<1x256xi32> to vector<5x256xi32>
    %12 = arith.cmpi eq, %10, %11 : vector<5x256xi32>
    %c255_i32 = arith.constant 255 : i32
    %13 = vector.broadcast %c255_i32 : i32 to vector<1x256xi32>
    %14 = arith.cmpi ne, %4, %13 : vector<1x256xi32>
    %15 = vector.broadcast %14 : vector<1x256xi1> to vector<5x256xi1>
    %16 = arith.andi %12, %15 : vector<5x256xi1>
    %cst = arith.constant 1.000000e+00 : f32
    %cst_9 = arith.constant 0.000000e+00 : f32
    %17 = vector.broadcast %cst : f32 to vector<5x256xf32>
    %18 = vector.broadcast %cst_9 : f32 to vector<5x256xf32>
    %19 = arith.select %16, %17, %18 : vector<5x256xi1>, vector<5x256xf32>
    %cst_10 = arith.constant dense<0.000000e+00> : vector<8x256xf32>
    %20 = tpu.matmul %9, %19, %cst_10 {dimension_numbers = #tpu.dot_dimension_numbers<[0], [0], [1], [1], [0, 1, 1, 1], [], []>} : vector<5x8xf32>, vector<5x256xf32>, vector<8x256xf32> -> vector<8x256xf32>
    %21 = arith.subf %7, %20 : vector<8x256xf32>
    %22 = arith.mulf %21, %21 : vector<8x256xf32>
    %cst_11 = arith.constant dense<0.000000e+00> : vector<256xf32>
    %23 = vector.multi_reduction <add>, %22, %cst_11 [0] : vector<8x256xf32> to vector<256xf32>
    %24 = vector.shape_cast %23 : vector<256xf32> to vector<1x256xf32>
    %cst_12 = arith.constant 9.99999996E-13 : f32
    %25 = vector.broadcast %cst_12 : f32 to vector<1x256xf32>
    %26 = arith.addf %24, %25 : vector<1x256xf32>
    %27 = math.sqrt %26 : vector<1x256xf32>
    %cst_13 = arith.constant 5.000000e-01 : f32
    %28 = vector.broadcast %cst_13 : f32 to vector<1x256xf32>
    %29 = arith.subf %27, %28 : vector<1x256xf32>
    %cst_14 = arith.constant 0.000000e+00 : f32
    %30 = vector.broadcast %cst_14 : f32 to vector<1x256xf32>
    %31 = arith.maximumf %29, %30 : vector<1x256xf32>
    %32 = arith.mulf %31, %31 : vector<1x256xf32>
    %c0_15 = arith.constant 0 : index
    %c0_16 = arith.constant 0 : index
    %c0_17 = arith.constant 0 : index
    %c0_18 = arith.constant 0 : index
    %33 = vector.load %arg6[%c0_15, %c0_16, %c0_17, %c0_18] : memref<1x1x5x1xf32, #tpu.memory_space<vmem>>, vector<1x1x5x1xf32>
    %34 = vector.broadcast %32 : vector<1x256xf32> to vector<5x256xf32>
    %35 = arith.mulf %19, %34 : vector<5x256xf32>
    %cst_19 = arith.constant dense<0.000000e+00> : vector<5xf32>
    %36 = vector.multi_reduction <add>, %35, %cst_19 [1] : vector<5x256xf32> to vector<5xf32>
    %37 = vector.shape_cast %36 : vector<5xf32> to vector<5x1xf32>
    %38 = vector.shape_cast %37 : vector<5x1xf32> to vector<1x1x5x1xf32>
    %39 = arith.addf %33, %38 : vector<1x1x5x1xf32>
    %c0_20 = arith.constant 0 : index
    %c0_21 = arith.constant 0 : index
    %c0_22 = arith.constant 0 : index
    %c0_23 = arith.constant 0 : index
    %40 = vector.load %arg6[%c0_20, %c0_21, %c0_22, %c0_23] : memref<1x1x5x1xf32, #tpu.memory_space<vmem>>, vector<1x1x5x1xf32>
    tpu.vector_store %arg6[%c0_20, %c0_21, %c0_22, %c0_23], %39 {strides = array<i32>} : memref<1x1x5x1xf32, #tpu.memory_space<vmem>>, vector<1x1x5x1xf32>,
    return
  }
  func.func @transform_0(%arg0: i32, %arg1: i32, %arg2: i32) -> (i32, i32, i32) {
    %c1_i32 = arith.constant 1 : i32
    %0 = arith.muli %arg1, %c1_i32 : i32
    %1 = arith.addi %0, %arg2 : i32
    %c0_i32 = arith.constant 0 : i32
    %c0_i32_0 = arith.constant 0 : i32
    return %arg0, %c0_i32, %1 : i32, i32, i32
  }
  func.func @transform_1(%arg0: i32, %arg1: i32, %arg2: i32) -> (i32, i32, i32) {
    %c1_i32 = arith.constant 1 : i32
    %0 = arith.muli %arg1, %c1_i32 : i32
    %1 = arith.addi %0, %arg2 : i32
    %c0_i32 = arith.constant 0 : i32
    %c0_i32_0 = arith.constant 0 : i32
    return %arg0, %c0_i32, %1 : i32, i32, i32
  }
  func.func @transform_2(%arg0: i32, %arg1: i32, %arg2: i32) -> (i32, i32, i32) {
    %c0_i32 = arith.constant 0 : i32
    %c0_i32_0 = arith.constant 0 : i32
    %c0_i32_1 = arith.constant 0 : i32
    return %arg0, %c0_i32, %c0_i32_0 : i32, i32, i32
  }
  func.func @transform_3(%arg0: i32, %arg1: i32, %arg2: i32) -> (i32, i32, i32, i32) {
    %c0_i32 = arith.constant 0 : i32
    %c0_i32_0 = arith.constant 0 : i32
    %c0_i32_1 = arith.constant 0 : i32
    return %arg0, %arg1, %c0_i32, %c0_i32_0 : i32, i32, i32, i32
  }
}

module attributes {stable_mosaic.version = 11 : i64} {
  func.func @_ce_kernel(%arg0: i32, %arg1: i32, %arg2: memref<1x1x256xi32, #tpu.memory_space<vmem>>, %arg3: memref<1x5x256xbf16, #tpu.memory_space<vmem>>, %arg4: memref<1x1x256xf32, #tpu.memory_space<vmem>>, %arg5: memref<1x1x256xf32, #tpu.memory_space<vmem>>) attributes {dimension_semantics = [#tpu.dimension_semantics<parallel>, #tpu.dimension_semantics<parallel>], iteration_bounds = array<i64: 2, 1>, scalar_prefetch = 0 : i64, scratch_operands = 0 : i64, tpu.core_type = #tpu.core_type<tc>, window_params = [{transform_indices = @transform_0, window_bounds = array<i64: 1, 1, 256>}, {transform_indices = @transform_1, window_bounds = array<i64: 1, 5, 256>}, {transform_indices = @transform_2, window_bounds = array<i64: 1, 1, 256>}, {transform_indices = @transform_3, window_bounds = array<i64: 1, 1, 256>}]} {
    %c0 = arith.constant 0 : index
    %c0_0 = arith.constant 0 : index
    %c0_1 = arith.constant 0 : index
    %0 = vector.load %arg3[%c0, %c0_0, %c0_1] : memref<1x5x256xbf16, #tpu.memory_space<vmem>>, vector<1x5x256xbf16>
    %1 = vector.shape_cast %0 : vector<1x5x256xbf16> to vector<5x256xbf16>
    %2 = arith.extf %1 : vector<5x256xbf16> to vector<5x256xf32>
    %c0_2 = arith.constant 0 : index
    %c0_3 = arith.constant 0 : index
    %c0_4 = arith.constant 0 : index
    %3 = vector.load %arg2[%c0_2, %c0_3, %c0_4] : memref<1x1x256xi32, #tpu.memory_space<vmem>>, vector<1x1x256xi32>
    %4 = vector.shape_cast %3 : vector<1x1x256xi32> to vector<1x256xi32>
    %5 = tpu.iota {dimensions = array<i32: 0>} : vector<5x256xi32>
    %6 = vector.broadcast %4 : vector<1x256xi32> to vector<5x256xi32>
    %7 = arith.cmpi eq, %5, %6 : vector<5x256xi32>
    %c255_i32 = arith.constant 255 : i32
    %8 = vector.broadcast %c255_i32 : i32 to vector<1x256xi32>
    %9 = arith.cmpi ne, %4, %8 : vector<1x256xi32>
    %10 = vector.broadcast %9 : vector<1x256xi1> to vector<5x256xi1>
    %11 = arith.andi %7, %10 : vector<5x256xi1>
    %cst = arith.constant 1.000000e+00 : f32
    %cst_5 = arith.constant 0.000000e+00 : f32
    %12 = vector.broadcast %cst : f32 to vector<5x256xf32>
    %13 = vector.broadcast %cst_5 : f32 to vector<5x256xf32>
    %14 = arith.select %11, %12, %13 : vector<5x256xi1>, vector<5x256xf32>
    %cst_6 = arith.constant dense<0xFF800000> : vector<256xf32>
    %15 = vector.multi_reduction <maximumf>, %2, %cst_6 [0] : vector<5x256xf32> to vector<256xf32>
    %16 = vector.shape_cast %15 : vector<256xf32> to vector<1x256xf32>
    %17 = vector.broadcast %16 : vector<1x256xf32> to vector<5x256xf32>
    %18 = arith.subf %2, %17 : vector<5x256xf32>
    %19 = math.exp %18 : vector<5x256xf32>
    %cst_7 = arith.constant dense<0.000000e+00> : vector<256xf32>
    %20 = vector.multi_reduction <add>, %19, %cst_7 [0] : vector<5x256xf32> to vector<256xf32>
    %21 = vector.shape_cast %20 : vector<256xf32> to vector<1x256xf32>
    %22 = math.log %21 : vector<1x256xf32>
    %23 = vector.broadcast %22 : vector<1x256xf32> to vector<5x256xf32>
    %24 = arith.subf %18, %23 : vector<5x256xf32>
    %25 = arith.mulf %24, %14 : vector<5x256xf32>
    %cst_8 = arith.constant dense<0.000000e+00> : vector<256xf32>
    %26 = vector.multi_reduction <add>, %25, %cst_8 [0] : vector<5x256xf32> to vector<256xf32>
    %27 = vector.shape_cast %26 : vector<256xf32> to vector<1x256xf32>
    %cst_9 = arith.constant 0.000000e+00 : f32
    %28 = vector.broadcast %cst_9 : f32 to vector<1x256xf32>
    %29 = arith.subf %28, %27 : vector<1x256xf32>
    %c0_10 = arith.constant 0 : index
    %c0_11 = arith.constant 0 : index
    %c0_12 = arith.constant 0 : index
    %30 = vector.load %arg4[%c0_10, %c0_11, %c0_12] : memref<1x1x256xf32, #tpu.memory_space<vmem>>, vector<1x1x256xf32>
    %31 = vector.shape_cast %30 : vector<1x1x256xf32> to vector<1x256xf32>
    %32 = vector.shape_cast %29 : vector<1x256xf32> to vector<1x1x256xf32>
    tpu.vector_store %arg4[%c0_10, %c0_11, %c0_12], %32 {strides = array<i32>} : memref<1x1x256xf32, #tpu.memory_space<vmem>>, vector<1x1x256xf32>,
    %33 = math.exp %27 : vector<1x256xf32>
    %c0_13 = arith.constant 0 : index
    %c0_14 = arith.constant 0 : index
    %c0_15 = arith.constant 0 : index
    %34 = vector.load %arg5[%c0_13, %c0_14, %c0_15] : memref<1x1x256xf32, #tpu.memory_space<vmem>>, vector<1x1x256xf32>
    %35 = vector.shape_cast %34 : vector<1x1x256xf32> to vector<1x256xf32>
    %36 = vector.shape_cast %33 : vector<1x256xf32> to vector<1x1x256xf32>
    tpu.vector_store %arg5[%c0_13, %c0_14, %c0_15], %36 {strides = array<i32>} : memref<1x1x256xf32, #tpu.memory_space<vmem>>, vector<1x1x256xf32>,
    return
  }
  func.func @transform_0(%arg0: i32, %arg1: i32) -> (i32, i32, i32) {
    %c0_i32 = arith.constant 0 : i32
    %c0_i32_0 = arith.constant 0 : i32
    return %arg0, %c0_i32, %arg1 : i32, i32, i32
  }
  func.func @transform_1(%arg0: i32, %arg1: i32) -> (i32, i32, i32) {
    %c0_i32 = arith.constant 0 : i32
    %c0_i32_0 = arith.constant 0 : i32
    return %arg0, %c0_i32, %arg1 : i32, i32, i32
  }
  func.func @transform_2(%arg0: i32, %arg1: i32) -> (i32, i32, i32) {
    %c0_i32 = arith.constant 0 : i32
    %c0_i32_0 = arith.constant 0 : i32
    return %arg0, %c0_i32, %arg1 : i32, i32, i32
  }
  func.func @transform_3(%arg0: i32, %arg1: i32) -> (i32, i32, i32) {
    %c0_i32 = arith.constant 0 : i32
    %c0_i32_0 = arith.constant 0 : i32
    return %arg0, %c0_i32, %arg1 : i32, i32, i32
  }
}

</mosaic_0001>

<llo_original>
// kernel: criterion_forward.4
$region0: #{criterion_forward.4}
  #allocation0 [shape = 'u32[]', space=smem, size = 0x4, offset = 0x4, fixed_abs, tag = 'smem constant byte address 0x4 - core index']
  #allocation1 [shape = 'u32[144,128]{1,0:T(1,128)}', space=vmem, size = 0x12000, scoped, tag = 'internal scratch']
  %s0 = inlined_call_operand.vmem [shape: s32[2,1,256], index: 0, kind: input, shape index: {}]
  %s1 = inlined_call_operand.vmem [shape: bf16[2,8,256], index: 1, kind: input, shape index: {}]
  %s2 = inlined_call_operand.vmem [shape: f32[2,1,5,8], index: 2, kind: output, shape index: {0}]
  %s3 = inlined_call_operand.vmem [shape: f32[2,1,5,1], index: 3, kind: output, shape index: {1}]
  %4 = xla_tuple %s2, %s3
  %s5 = sld [smem:[#allocation0]]
  $region53: #{criterion_forward.4} parent=0
    _
  %s7 = ssub.s32 1, %s5
  %s8 = scalar_select 0, %s7, %s5
  loop: start=0, step=1, limit=4
  $region2: #{criterion_forward.4} parent=0 // loop_pre_header
    _
  $region3: #{criterion_forward.4} parent=0 // loop_header
    %s10 = sphi 0, %s14
    %p11 = scmp.ge.s32.totalorder %s10, 4
    %s17 = sphi 0, %s36
    %s18 = sphi 0, %s32
    %s19 = sphi 0, %s28
    %s20 = sphi 0, %s17
    %s21 = sphi 0, %s18
    %s22 = sphi 0, %s19
    %s23 = sphi 0, %s20
    %s24 = sphi 0, %s21
    %s25 = sphi 0, %s22
    %s43 = sphi 0, %s45
    %s46 = sphi 0, %s43
    %s47 = sphi 0, %s46
    %s63 = sphi 0, %s47
    %s73 = sphi 0, %s75
    %s76 = sphi 0, %s73
    %s77 = sphi 0, %s76
    %s93 = sphi 0, %s77
    %s101 = sphi 0, %s103
    %s104 = sphi 0, %s101
    %s105 = sphi 0, %s104
    %s121 = sphi 0, %s105
    %s129 = sphi 0, %s131
    %s132 = sphi 0, %s129
    %s133 = sphi 0, %s132
    %s149 = sphi 0, %s133
  $region4: #{criterion_forward.4} parent=0 // loop_header_branch
    %13 = sbr.rel (%p11) target = $region8
  $region5: #{criterion_forward.4} parent=0 // loop_body
    %s15 = ssub.s32 %s10, 1
    %s16 = ssub.s32 %s10, 2
    %s26 = sadd.s32 1, %s19
    %p27 = scmp.ge.s32.totalorder %s26, 1
    %s28 = scalar_select %p27, 0, %s26
    %s29 = sadd.s32 1, %s18
    %s30 = scalar_select %p27, %s29, %s18
    %p31 = scmp.ge.s32.totalorder %s30, 1
    %s32 = scalar_select %p31, 0, %s30
    %s33 = sadd.s32 1, %s17
    %s34 = scalar_select %p31, %s33, %s17
    %p35 = scmp.ge.s32.totalorder %s34, 2
    %s36 = scalar_select %p35, 0, %s34
    %s37 = sadd.s32 %s18, %s19
    %s38 = sadd.s32 %s32, %s28
    %s39 = ssub.s32 %s17, %s36
    %s40 = ssub.s32 %s37, %s38
    %s41 = sor.u32 %s39, %s40
    %p42 = scmp.eq.s32.totalorder %s41, 0
    %s44 = sadd.s32 %s43, 1
    %s45 = scalar_select %p42, %s43, %s44
    %p48 = pneg %p42
    %p49 = scmp.eq.s32.totalorder %s10, 1
    %p50 = por %p48, %p49
    %p51 = scmp.ne.s32.totalorder %s43, %s46
    %p52 = scmp.eq.s32.totalorder %s10, 0
    %p53 = por %p51, %p52
    %p54 = scmp.ne.s32.totalorder %s43, %s46
    %p55 = scmp.eq.s32.totalorder %s15, 1
    %p56 = por %p54, %p55
    %p57 = scmp.ne.s32.totalorder %s46, %s47
    %p58 = scmp.eq.s32.totalorder %s15, 0
    %p59 = por %p57, %p58
    %p60 = scmp.ne.s32.totalorder %s46, %s47
    %p61 = scmp.eq.s32.totalorder %s16, 1
    %p62 = por %p60, %p61
    %p64 = scmp.ne.s32.totalorder %s47, %s63
    %p65 = scmp.eq.s32.totalorder %s16, 0
    %p66 = por %p64, %p65
    %s67 = sadd.s32 %s18, %s19
    %s68 = sadd.s32 %s32, %s28
    %s69 = ssub.s32 %s17, %s36
    %s70 = ssub.s32 %s67, %s68
    %s71 = sor.u32 %s69, %s70
    %p72 = scmp.eq.s32.totalorder %s71, 0
    %s74 = sadd.s32 %s73, 1
    %s75 = scalar_select %p72, %s73, %s74
    %p78 = pneg %p72
    %p79 = scmp.eq.s32.totalorder %s10, 1
    %p80 = por %p78, %p79
    %p81 = scmp.ne.s32.totalorder %s73, %s76
    %p82 = scmp.eq.s32.totalorder %s10, 0
    %p83 = por %p81, %p82
    %p84 = scmp.ne.s32.totalorder %s73, %s76
    %p85 = scmp.eq.s32.totalorder %s15, 1
    %p86 = por %p84, %p85
    %p87 = scmp.ne.s32.totalorder %s76, %s77
    %p88 = scmp.eq.s32.totalorder %s15, 0
    %p89 = por %p87, %p88
    %p90 = scmp.ne.s32.totalorder %s76, %s77
    %p91 = scmp.eq.s32.totalorder %s16, 1
    %p92 = por %p90, %p91
    %p94 = scmp.ne.s32.totalorder %s77, %s93
    %p95 = scmp.eq.s32.totalorder %s16, 0
    %p96 = por %p94, %p95
    %s97 = ssub.s32 %s17, %s36
    %s98 = ssub.s32 %s18, %s32
    %s99 = sor.u32 %s97, %s98
    %p100 = scmp.eq.s32.totalorder %s99, 0
    %s102 = sadd.s32 %s101, 1
    %s103 = scalar_select %p100, %s101, %s102
    %p106 = pneg %p100
    %p107 = scmp.eq.s32.totalorder %s10, 1
    %p108 = por %p106, %p107
    %p109 = scmp.ne.s32.totalorder %s101, %s104
    %p110 = scmp.eq.s32.totalorder %s10, 0
    %p111 = por %p109, %p110
    %p112 = scmp.ne.s32.totalorder %s101, %s104
    %p113 = scmp.eq.s32.totalorder %s15, 1
    %p114 = por %p112, %p113
    %p115 = scmp.ne.s32.totalorder %s104, %s105
    %p116 = scmp.eq.s32.totalorder %s15, 0
    %p117 = por %p115, %p116
    %p118 = scmp.ne.s32.totalorder %s104, %s105
    %p119 = scmp.eq.s32.totalorder %s16, 1
    %p120 = por %p118, %p119
    %p122 = scmp.ne.s32.totalorder %s105, %s121
    %p123 = scmp.eq.s32.totalorder %s16, 0
    %p124 = por %p122, %p123
    %s125 = ssub.s32 %s17, %s36
    %s126 = ssub.s32 %s18, %s32
    %s127 = sor.u32 %s125, %s126
    %p128 = scmp.eq.s32.totalorder %s127, 0
    %s130 = sadd.s32 %s129, 1
    %s131 = scalar_select %p128, %s129, %s130
    %p134 = pneg %p128
    %p135 = scmp.eq.s32.totalorder %s10, 1
    %p136 = por %p134, %p135
    %p137 = scmp.ne.s32.totalorder %s129, %s132
    %p138 = scmp.eq.s32.totalorder %s10, 0
    %p139 = por %p137, %p138
    %p140 = scmp.ne.s32.totalorder %s129, %s132
    %p141 = scmp.eq.s32.totalorder %s15, 1
    %p142 = por %p140, %p141
    %p143 = scmp.ne.s32.totalorder %s132, %s133
    %p144 = scmp.eq.s32.totalorder %s15, 0
    %p145 = por %p143, %p144
    %p146 = scmp.ne.s32.totalorder %s132, %s133
    %p147 = scmp.eq.s32.totalorder %s16, 1
    %p148 = por %p146, %p147
    %p150 = scmp.ne.s32.totalorder %s133, %s149
    %p151 = scmp.eq.s32.totalorder %s16, 0
    %p152 = por %p150, %p151
    %p153 = scmp.le.s32.totalorder 1, %s10
    %p154 = scmp.lt.s32.totalorder %s10, 3
    %p155 = pnand %p153, %p154
    %p156 = pneg %p155
    // Predicated region
    $region9: #{criterion_forward.4} parent=5 // pred_check
      _
    $region10: #{criterion_forward.4} parent=5 // pred_check_branch
      %158 = sbr.rel (%p155) target = $region12
    $region11: #{criterion_forward.4} parent=5 // pred_region
      %s159 = ssub.s32 %s10, 1
    $region12: #{criterion_forward.4} parent=5 // pred_fallthru
      _
    %p160 = scmp.lt.s32.totalorder %s10, 2
    // Predicated region
    $region13: #{criterion_forward.4} parent=5 // pred_check
      %p161 = pneg %p160
    $region14: #{criterion_forward.4} parent=5 // pred_check_branch
      %163 = sbr.rel (%p161) target = $region16
    $region15: #{criterion_forward.4} parent=5 // pred_region
      // Predicated region
      $region17: #{criterion_forward.4} parent=15 // pred_check
        %p164 = pneg %p53
      $region18: #{criterion_forward.4} parent=15 // pred_check_branch
        %166 = sbr.rel (%p164) target = $region20
      $region19: #{criterion_forward.4} parent=15 // pred_region
        %s167 = sadd.s32 %s18, %s19
        %s168 = smul.u32 2, %s167
        %p169 = scmp.lt.s32.totalorder %s17, 1
        %s170 = scalar_select %p169, %s17, 1
        %p171 = scmp.lt.s32.totalorder %s168, 1
        %s172 = scalar_select %p171, %s168, 1
        %s173 = smul.addr %s170, 2
        %s174 = sadd.s32 %s172, %s173
        %s175 = scalar_lea.vmem %s0, %s174
        %s176 = sadd.s32 %s18, %s19
        %s177 = smul.u32 2, %s176
      $region20: #{criterion_forward.4} parent=15 // pred_fallthru
        _
      // Predicated region
      $region21: #{criterion_forward.4} parent=15 // pred_check
        %p178 = pneg %p83
      $region22: #{criterion_forward.4} parent=15 // pred_check_branch
        %180 = sbr.rel (%p178) target = $region24
      $region23: #{criterion_forward.4} parent=15 // pred_region
        %s181 = sadd.s32 %s18, %s19
        %s182 = smul.u32 2, %s181
        %p183 = scmp.lt.s32.totalorder %s17, 1
        %s184 = scalar_select %p183, %s17, 1
        %p185 = scmp.lt.s32.totalorder %s182, 1
        %s186 = scalar_select %p185, %s182, 1
        %s187 = smul.addr %s184, 2
        %s188 = sadd.s32 %s186, %s187
        %s189 = smul.addr %s188, 4
        %s190 = scalar_lea.vmem %s1, %s189
        %s191 = sadd.s32 %s18, %s19
        %s192 = smul.u32 2, %s191
      $region24: #{criterion_forward.4} parent=15 // pred_fallthru
        _
    $region16: #{criterion_forward.4} parent=5 // pred_fallthru
      _
    %p193 = scmp.le.s32.totalorder 1, %s10
    %p194 = scmp.lt.s32.totalorder %s10, 3
    %p195 = pnand %p193, %p194
    %p196 = pneg %p195
    // Predicated region
    $region25: #{criterion_forward.4} parent=5 // pred_check
      _
    $region26: #{criterion_forward.4} parent=5 // pred_check_branch
      %198 = sbr.rel (%p195) target = $region28
    $region27: #{criterion_forward.4} parent=5 // pred_region
      %s199 = ssub.s32 %s10, 1
      %s200 = sadd.s32 %s21, %s22
      %s201 = smul.u32 2, %s200
      %p202 = scmp.lt.s32.totalorder %s20, 1
      %s203 = scalar_select %p202, %s20, 1
      %p204 = scmp.lt.s32.totalorder %s201, 1
      %s205 = scalar_select %p204, %s201, 1
      %s206 = smul.addr %s203, 2
      %s207 = sadd.s32 %s205, %s206
      %s208 = scalar_lea.vmem %s0, %s207
      %p209 = pneg %p59
      %p210 = pneg %p56
      %s211 = sadd.s32 %s21, %s22
      %s212 = smul.u32 2, %s211
      %p213 = scmp.lt.s32.totalorder %s20, 1
      %s214 = scalar_select %p213, %s20, 1
      %p215 = scmp.lt.s32.totalorder %s212, 1
      %s216 = scalar_select %p215, %s212, 1
      %s217 = smul.addr %s214, 2
      %s218 = sadd.s32 %s216, %s217
      %s219 = smul.addr %s218, 4
      %s220 = scalar_lea.vmem %s1, %s219
      %p221 = pneg %p89
      %p222 = pneg %p86
      %p223 = pneg %p117
      %p224 = pneg %p114
      %p225 = scmp.lt.s32.totalorder %s20, 1
      %s226 = scalar_select %p225, %s20, 1
      %p227 = scmp.lt.s32.totalorder %s21, 0
      %s228 = scalar_select %p227, %s21, 0
      %s229 = sadd.s32 %s228, %s226
      %s230 = smul.addr %s229, 8
      %s231 = scalar_lea.vmem %s2, %s230
      %p232 = pneg %p145
      %p233 = pneg %p142
      %p234 = scmp.lt.s32.totalorder %s20, 1
      %s235 = scalar_select %p234, %s20, 1
      %p236 = scmp.lt.s32.totalorder %s21, 0
      %s237 = scalar_select %p236, %s21, 0
      %s238 = sadd.s32 %s237, %s235
      %s239 = smul.addr %s238, 8
      %s240 = scalar_lea.vmem %s3, %s239
      %s241 = sadd.s32 %s21, %s22
      %s242 = smul.u32 2, %s241
      %p243 = scmp.lt.s32.totalorder %s20, 1
      %s244 = scalar_select %p243, %s20, 1
      %p245 = scmp.lt.s32.totalorder %s242, 1
      %s246 = scalar_select %p245, %s242, 1
      %s247 = smul.addr %s244, 2
      %s248 = sadd.s32 %s246, %s247
      %s249 = scalar_lea.vmem %s0, %s248
      %s250 = sadd.s32 %s21, %s22
      %s251 = smul.u32 2, %s250
      %s252 = sadd.s32 %s21, %s22
      %s253 = smul.u32 2, %s252
      %p254 = scmp.lt.s32.totalorder %s20, 1
      %s255 = scalar_select %p254, %s20, 1
      %p256 = scmp.lt.s32.totalorder %s253, 1
      %s257 = scalar_select %p256, %s253, 1
      %s258 = smul.addr %s255, 2
      %s259 = sadd.s32 %s257, %s258
      %s260 = smul.addr %s259, 4
      %s261 = scalar_lea.vmem %s1, %s260
      %s262 = sadd.s32 %s21, %s22
      %s263 = smul.u32 2, %s262
      %p264 = scmp.lt.s32.totalorder %s20, 1
      %s265 = scalar_select %p264, %s20, 1
      %p266 = scmp.lt.s32.totalorder %s21, 0
      %s267 = scalar_select %p266, %s21, 0
      %s268 = sadd.s32 %s267, %s265
      %s269 = smul.addr %s268, 8
      %s270 = scalar_lea.vmem %s2, %s269
      %p271 = scmp.lt.s32.totalorder %s20, 1
      %s272 = scalar_select %p271, %s20, 1
      %p273 = scmp.lt.s32.totalorder %s21, 0
      %s274 = scalar_select %p273, %s21, 0
      %s275 = sadd.s32 %s274, %s272
      %s276 = smul.addr %s275, 8
      %s277 = scalar_lea.vmem %s3, %s276
      %p278 = scmp.eq.s32.totalorder %s22, 0
      // Predicated region
      $region29: #{criterion_forward.4} parent=27 // pred_check
        %p279 = pneg %p278
      $region30: #{criterion_forward.4} parent=27 // pred_check_branch
        %281 = sbr.rel (%p279) target = $region32
      $region31: #{criterion_forward.4} parent=27 // pred_region
        %vm282 = vcmask 61440
        %283 = vst.msk [vmem:[%s270] sm:$0x1f] %vm282, 0.0
        %vm284 = vcmask 4096
        %285 = vst.msk [vmem:[%s277] sm:$0x1f] %vm284, 0.0
      $region32: #{criterion_forward.4} parent=27 // pred_fallthru
        _
      %v286 = vld [vmem:[%s249] sm:$0x3]
      %v287 = vld [vmem:[%s261] sm:$0xff]
      %v288 = vunpack.c.l.bf16 %v287
      %v289 = vunpack.c.h.bf16 %v287
      %v290 = vlaneseq
      %v291 = vshrl.u32 %v290, 7
      %v292 = vlaneseq
      %v293 = vshrl.u32 %v292, 7
      %v294 = vsub.s32 0, %v293
      %v295 = vrot.slane %v286, %v294
      %v296 = vlaneseq
      %v297 = vshrl.u32 %v296, 7
      %v298 = vsub.s32 1, %v297
      %v299 = vrot.slane %v286, %v298
      %vm300 = vcmp.eq.s32.totalorder %v291, %v295
      %vm301 = vcmp.eq.s32.totalorder %v291, %v299
      %vm302 = vcmp.ne.s32.totalorder %v286, 255
      %v303 = vsel %vm302, 1, 0
      %v304 = vlaneseq
      %v305 = vshrl.u32 %v304, 7
      %v306 = vsub.s32 0, %v305
      %v307 = vrot.slane %v303, %v306
      %v308 = vlaneseq
      %v309 = vshrl.u32 %v308, 7
      %v310 = vsub.s32 1, %v309
      %v311 = vrot.slane %v303, %v310
      %vm312 = vcmp.eq.s32.totalorder %v307, 1
      %vm313 = vcmp.eq.s32.totalorder %v311, 1
      %vm314 = vmand %vm300, %vm312
      %vm315 = vmand %vm301, %vm313
      %v316 = vsel %vm314, 1.0, 0.0
      %v317 = vsel %vm315, 1.0, 0.0
      %318 = vmatprep.subr.mxu0 0.0
      %319 = vmatpush1.xpose.msra.mxu0 0.0
      %320 = vmatprep.subr.mxu0 0.0
      %321 = vmatpush1.xpose.msra.mxu0 0.0
      %322 = vmatprep.subr.mxu0 0.0
      %323 = vmatpush1.xpose.msra.mxu0 0.0
      %324 = vmatprep.subr.mxu0 0.0
      %325 = vmatpush1.xpose.msra.mxu0 0.0
      %326 = vmatprep.subr.mxu0 0.0
      %327 = vmatpush1.xpose.msra.mxu0 0.0
      %328 = vmatprep.subr.mxu0 0.0
      %329 = vmatpush1.xpose.msra.mxu0 0.0
      %330 = vmatprep.subr.mxu0 0.0
      %331 = vmatpush1.xpose.msra.mxu0 0.0
      %332 = vmatprep.subr.mxu0 0.0
      %333 = vmatpush1.xpose.msra.mxu0 0.0
      %334 = vmatprep.subr.mxu0 0.0
      %335 = vmatpush1.xpose.msra.mxu0 0.0
      %336 = vmatprep.subr.mxu0 0.0
      %337 = vmatpush1.xpose.msra.mxu0 0.0
      %338 = vmatprep.subr.mxu0 0.0
      %339 = vmatpush1.xpose.msra.mxu0 0.0
      %340 = vmatprep.subr.mxu0 0.0
      %341 = vmatpush1.xpose.msra.mxu0 0.0
      %342 = vmatprep.subr.mxu0 0.0
      %343 = vmatpush1.xpose.msra.mxu0 0.0
      %344 = vmatprep.subr.mxu0 0.0
      %345 = vmatpush1.xpose.msra.mxu0 0.0
      %346 = vmatprep.subr.mxu0 0.0
      %347 = vmatpush1.xpose.msra.mxu0 0.0
      %348 = vmatprep.subr.mxu0 %v289
      %349 = vmatpush1.xpose.msra.mxu0 %v288
      %350 = vmatprep.subr.mxu0 0.0
      %351 = vmatpush2.xpose.msra.mxu0 0.0
      %352 = vmatprep.subr.mxu0 0.0
      %353 = vmatpush2.xpose.msra.mxu0 0.0
      %354 = vmatprep.subr.mxu0 0.0
      %355 = vmatpush2.xpose.msra.mxu0 0.0
      %356 = vmatprep.subr.mxu0 0.0
      %357 = vmatpush2.xpose.msra.mxu0 0.0
      %358 = vmatprep.subr.mxu0 0.0
      %359 = vmatpush2.xpose.msra.mxu0 0.0
      %360 = vmatprep.subr.mxu0 0.0
      %361 = vmatpush2.xpose.msra.mxu0 0.0
      %362 = vmatprep.subr.mxu0 0.0
      %363 = vmatpush2.xpose.msra.mxu0 0.0
      %364 = vmatprep.subr.mxu0 0.0
      %365 = vmatpush2.xpose.msra.mxu0 0.0
      %366 = vmatprep.subr.mxu0 0.0
      %367 = vmatpush2.xpose.msra.mxu0 0.0
      %368 = vmatprep.subr.mxu0 0.0
      %369 = vmatpush2.xpose.msra.mxu0 0.0
      %370 = vmatprep.subr.mxu0 0.0
      %371 = vmatpush2.xpose.msra.mxu0 0.0
      %372 = vmatprep.subr.mxu0 0.0
      %373 = vmatpush2.xpose.msra.mxu0 0.0
      %374 = vmatprep.subr.mxu0 0.0
      %375 = vmatpush2.xpose.msra.mxu0 0.0
      %376 = vmatprep.subr.mxu0 0.0
      %377 = vmatpush2.xpose.msra.mxu0 0.0
      %378 = vmatprep.subr.mxu0 0.0
      %379 = vmatpush2.xpose.msra.mxu0 0.0
      %380 = vmatprep.subr.mxu0 0.0
      %381 = vmatpush2.xpose.msra.mxu0 0.0
      %382 = vmatprep.mubr.f32.mxu0 %v317
      %383 = vmatmul.mubr.f32.gmra.mxu0 %v316
      %v384 = vpop.f32.mrf.mxu0
      %v385 = vadd.f32 0.0, %v384
      %v386 = vpop.f32.mrf.mxu0
      %387 = vdwg.mxu0
      %v388 = vld [vmem:[%s270] sm:$0x1f]
      %v389 = vadd.f32 %v388, %v385
      %vm390 = vcmask 61440
      %391 = vst.msk [vmem:[%s270] sm:$0x1f] %vm390, %v389
      %v392 = vld [vmem:[%s277] sm:$0x1f]
      %vm393 = vcmask 1044480
      %v394 = vsel %vm393, %v316, 0.0
      %v395 = vsel %vm393, %v317, 0.0
      %v396 = vadd.f32 %v394, %v395
      %397 = vadd.xlane.f32.xlu0 %v396
      %v398 = vpop.xlane.xlu0 %397
      %v399 = vadd.f32 %v392, %v398
      %vm400 = vcmask 4096
      %401 = vst.msk [vmem:[%s277] sm:$0x1f] %vm400, %v399
      %p402 = scmp.lt.s32.totalorder %s20, 1
      %s403 = scalar_select %p402, %s20, 1
      %p404 = scmp.lt.s32.totalorder %s21, 0
      %s405 = scalar_select %p404, %s21, 0
      %s406 = sadd.s32 %s405, %s403
      %s407 = smul.addr %s406, 8
      %s408 = scalar_lea.vmem %s2, %s407
      %p409 = scmp.lt.s32.totalorder %s20, 1
      %s410 = scalar_select %p409, %s20, 1
      %p411 = scmp.lt.s32.totalorder %s21, 0
      %s412 = scalar_select %p411, %s21, 0
      %s413 = sadd.s32 %s412, %s410
      %s414 = smul.addr %s413, 8
      %s415 = scalar_lea.vmem %s3, %s414
      // Predicated region
      $region33: #{criterion_forward.4} parent=27 // pred_check
        %p416 = pneg %p114
      $region34: #{criterion_forward.4} parent=27 // pred_check_branch
        %418 = sbr.rel (%p416) target = $region36
      $region35: #{criterion_forward.4} parent=27 // pred_region
        _
      $region36: #{criterion_forward.4} parent=27 // pred_fallthru
        _
      // Predicated region
      $region37: #{criterion_forward.4} parent=27 // pred_check
        %p419 = pneg %p142
      $region38: #{criterion_forward.4} parent=27 // pred_check_branch
        %421 = sbr.rel (%p419) target = $region40
      $region39: #{criterion_forward.4} parent=27 // pred_region
        _
      $region40: #{criterion_forward.4} parent=27 // pred_fallthru
        _
    $region28: #{criterion_forward.4} parent=5 // pred_fallthru
      _
    %p422 = scmp.le.s32.totalorder 2, %s10
    // Predicated region
    $region41: #{criterion_forward.4} parent=5 // pred_check
      %p423 = pneg %p422
    $region42: #{criterion_forward.4} parent=5 // pred_check_branch
      %425 = sbr.rel (%p423) target = $region44
    $region43: #{criterion_forward.4} parent=5 // pred_region
      %s426 = ssub.s32 %s10, 2
      // Predicated region
      $region45: #{criterion_forward.4} parent=43 // pred_check
        %p427 = pneg %p120
      $region46: #{criterion_forward.4} parent=43 // pred_check_branch
        %429 = sbr.rel (%p427) target = $region48
      $region47: #{criterion_forward.4} parent=43 // pred_region
        %p430 = scmp.lt.s32.totalorder %s23, 1
        %s431 = scalar_select %p430, %s23, 1
        %p432 = scmp.lt.s32.totalorder %s24, 0
        %s433 = scalar_select %p432, %s24, 0
        %s434 = sadd.s32 %s433, %s431
        %s435 = smul.addr %s434, 8
        %s436 = scalar_lea.vmem %s2, %s435
      $region48: #{criterion_forward.4} parent=43 // pred_fallthru
        _
      // Predicated region
      $region49: #{criterion_forward.4} parent=43 // pred_check
        %p437 = pneg %p148
      $region50: #{criterion_forward.4} parent=43 // pred_check_branch
        %439 = sbr.rel (%p437) target = $region52
      $region51: #{criterion_forward.4} parent=43 // pred_region
        %p440 = scmp.lt.s32.totalorder %s23, 1
        %s441 = scalar_select %p440, %s23, 1
        %p442 = scmp.lt.s32.totalorder %s24, 0
        %s443 = scalar_select %p442, %s24, 0
        %s444 = sadd.s32 %s443, %s441
        %s445 = smul.addr %s444, 8
        %s446 = scalar_lea.vmem %s3, %s445
      $region52: #{criterion_forward.4} parent=43 // pred_fallthru
        _
    $region44: #{criterion_forward.4} parent=5 // pred_fallthru
      _
  $region6: #{criterion_forward.4} parent=0 // loop_footer
    %s14 = sadd.s32 1, %s10
  $region7: #{criterion_forward.4} parent=0 // loop_footer_branch
    %9 = sbr.rel target = $region3
  $region8: #{criterion_forward.4} parent=0 // loop_exit
    _

// kernel: criterion_forward.5
$region0: #{criterion_forward.5}
  #allocation0 [shape = 'u32[]', space=smem, size = 0x4, offset = 0x4, fixed_abs, tag = 'smem constant byte address 0x4 - core index']
  #allocation1 [shape = 'u32[144,128]{1,0:T(1,128)}', space=vmem, size = 0x12000, scoped, tag = 'internal scratch']
  %s0 = inlined_call_operand.vmem [shape: s32[2,1,256], index: 0, kind: input, shape index: {}]
  %s1 = inlined_call_operand.vmem [shape: bf16[2,8,256], index: 1, kind: input, shape index: {}]
  %s2 = inlined_call_operand.vmem [shape: f32[2,5,8], index: 2, kind: input, shape index: {}]
  %s3 = inlined_call_operand.vmem [shape: f32[2,1,5,1], index: 3, kind: output, shape index: {}]
  %s4 = sld [smem:[#allocation0]]
  $region49: #{criterion_forward.5} parent=0
    _
  %s6 = ssub.s32 1, %s4
  %s7 = scalar_select 0, %s6, %s4
  loop: start=0, step=1, limit=4
  $region2: #{criterion_forward.5} parent=0 // loop_pre_header
    _
  $region3: #{criterion_forward.5} parent=0 // loop_header
    %s9 = sphi 0, %s13
    %p10 = scmp.ge.s32.totalorder %s9, 4
    %s16 = sphi 0, %s35
    %s17 = sphi 0, %s31
    %s18 = sphi 0, %s27
    %s19 = sphi 0, %s16
    %s20 = sphi 0, %s17
    %s21 = sphi 0, %s18
    %s22 = sphi 0, %s19
    %s23 = sphi 0, %s20
    %s24 = sphi 0, %s21
    %s42 = sphi 0, %s44
    %s45 = sphi 0, %s42
    %s46 = sphi 0, %s45
    %s62 = sphi 0, %s46
    %s72 = sphi 0, %s74
    %s75 = sphi 0, %s72
    %s76 = sphi 0, %s75
    %s92 = sphi 0, %s76
    %s98 = sphi 0, %s100
    %s101 = sphi 0, %s98
    %s102 = sphi 0, %s101
    %s118 = sphi 0, %s102
    %s126 = sphi 0, %s128
    %s129 = sphi 0, %s126
    %s130 = sphi 0, %s129
    %s146 = sphi 0, %s130
  $region4: #{criterion_forward.5} parent=0 // loop_header_branch
    %12 = sbr.rel (%p10) target = $region8
  $region5: #{criterion_forward.5} parent=0 // loop_body
    %s14 = ssub.s32 %s9, 1
    %s15 = ssub.s32 %s9, 2
    %s25 = sadd.s32 1, %s18
    %p26 = scmp.ge.s32.totalorder %s25, 1
    %s27 = scalar_select %p26, 0, %s25
    %s28 = sadd.s32 1, %s17
    %s29 = scalar_select %p26, %s28, %s17
    %p30 = scmp.ge.s32.totalorder %s29, 1
    %s31 = scalar_select %p30, 0, %s29
    %s32 = sadd.s32 1, %s16
    %s33 = scalar_select %p30, %s32, %s16
    %p34 = scmp.ge.s32.totalorder %s33, 2
    %s35 = scalar_select %p34, 0, %s33
    %s36 = sadd.s32 %s17, %s18
    %s37 = sadd.s32 %s31, %s27
    %s38 = ssub.s32 %s16, %s35
    %s39 = ssub.s32 %s36, %s37
    %s40 = sor.u32 %s38, %s39
    %p41 = scmp.eq.s32.totalorder %s40, 0
    %s43 = sadd.s32 %s42, 1
    %s44 = scalar_select %p41, %s42, %s43
    %p47 = pneg %p41
    %p48 = scmp.eq.s32.totalorder %s9, 1
    %p49 = por %p47, %p48
    %p50 = scmp.ne.s32.totalorder %s42, %s45
    %p51 = scmp.eq.s32.totalorder %s9, 0
    %p52 = por %p50, %p51
    %p53 = scmp.ne.s32.totalorder %s42, %s45
    %p54 = scmp.eq.s32.totalorder %s14, 1
    %p55 = por %p53, %p54
    %p56 = scmp.ne.s32.totalorder %s45, %s46
    %p57 = scmp.eq.s32.totalorder %s14, 0
    %p58 = por %p56, %p57
    %p59 = scmp.ne.s32.totalorder %s45, %s46
    %p60 = scmp.eq.s32.totalorder %s15, 1
    %p61 = por %p59, %p60
    %p63 = scmp.ne.s32.totalorder %s46, %s62
    %p64 = scmp.eq.s32.totalorder %s15, 0
    %p65 = por %p63, %p64
    %s66 = sadd.s32 %s17, %s18
    %s67 = sadd.s32 %s31, %s27
    %s68 = ssub.s32 %s16, %s35
    %s69 = ssub.s32 %s66, %s67
    %s70 = sor.u32 %s68, %s69
    %p71 = scmp.eq.s32.totalorder %s70, 0
    %s73 = sadd.s32 %s72, 1
    %s74 = scalar_select %p71, %s72, %s73
    %p77 = pneg %p71
    %p78 = scmp.eq.s32.totalorder %s9, 1
    %p79 = por %p77, %p78
    %p80 = scmp.ne.s32.totalorder %s72, %s75
    %p81 = scmp.eq.s32.totalorder %s9, 0
    %p82 = por %p80, %p81
    %p83 = scmp.ne.s32.totalorder %s72, %s75
    %p84 = scmp.eq.s32.totalorder %s14, 1
    %p85 = por %p83, %p84
    %p86 = scmp.ne.s32.totalorder %s75, %s76
    %p87 = scmp.eq.s32.totalorder %s14, 0
    %p88 = por %p86, %p87
    %p89 = scmp.ne.s32.totalorder %s75, %s76
    %p90 = scmp.eq.s32.totalorder %s15, 1
    %p91 = por %p89, %p90
    %p93 = scmp.ne.s32.totalorder %s76, %s92
    %p94 = scmp.eq.s32.totalorder %s15, 0
    %p95 = por %p93, %p94
    %s96 = ssub.s32 %s16, %s35
    %p97 = scmp.eq.s32.totalorder %s96, 0
    %s99 = sadd.s32 %s98, 1
    %s100 = scalar_select %p97, %s98, %s99
    %p103 = pneg %p97
    %p104 = scmp.eq.s32.totalorder %s9, 1
    %p105 = por %p103, %p104
    %p106 = scmp.ne.s32.totalorder %s98, %s101
    %p107 = scmp.eq.s32.totalorder %s9, 0
    %p108 = por %p106, %p107
    %p109 = scmp.ne.s32.totalorder %s98, %s101
    %p110 = scmp.eq.s32.totalorder %s14, 1
    %p111 = por %p109, %p110
    %p112 = scmp.ne.s32.totalorder %s101, %s102
    %p113 = scmp.eq.s32.totalorder %s14, 0
    %p114 = por %p112, %p113
    %p115 = scmp.ne.s32.totalorder %s101, %s102
    %p116 = scmp.eq.s32.totalorder %s15, 1
    %p117 = por %p115, %p116
    %p119 = scmp.ne.s32.totalorder %s102, %s118
    %p120 = scmp.eq.s32.totalorder %s15, 0
    %p121 = por %p119, %p120
    %s122 = ssub.s32 %s16, %s35
    %s123 = ssub.s32 %s17, %s31
    %s124 = sor.u32 %s122, %s123
    %p125 = scmp.eq.s32.totalorder %s124, 0
    %s127 = sadd.s32 %s126, 1
    %s128 = scalar_select %p125, %s126, %s127
    %p131 = pneg %p125
    %p132 = scmp.eq.s32.totalorder %s9, 1
    %p133 = por %p131, %p132
    %p134 = scmp.ne.s32.totalorder %s126, %s129
    %p135 = scmp.eq.s32.totalorder %s9, 0
    %p136 = por %p134, %p135
    %p137 = scmp.ne.s32.totalorder %s126, %s129
    %p138 = scmp.eq.s32.totalorder %s14, 1
    %p139 = por %p137, %p138
    %p140 = scmp.ne.s32.totalorder %s129, %s130
    %p141 = scmp.eq.s32.totalorder %s14, 0
    %p142 = por %p140, %p141
    %p143 = scmp.ne.s32.totalorder %s129, %s130
    %p144 = scmp.eq.s32.totalorder %s15, 1
    %p145 = por %p143, %p144
    %p147 = scmp.ne.s32.totalorder %s130, %s146
    %p148 = scmp.eq.s32.totalorder %s15, 0
    %p149 = por %p147, %p148
    %p150 = scmp.le.s32.totalorder 1, %s9
    %p151 = scmp.lt.s32.totalorder %s9, 3
    %p152 = pnand %p150, %p151
    %p153 = pneg %p152
    // Predicated region
    $region9: #{criterion_forward.5} parent=5 // pred_check
      _
    $region10: #{criterion_forward.5} parent=5 // pred_check_branch
      %155 = sbr.rel (%p152) target = $region12
    $region11: #{criterion_forward.5} parent=5 // pred_region
      %s156 = ssub.s32 %s9, 1
    $region12: #{criterion_forward.5} parent=5 // pred_fallthru
      _
    %p157 = scmp.lt.s32.totalorder %s9, 2
    // Predicated region
    $region13: #{criterion_forward.5} parent=5 // pred_check
      %p158 = pneg %p157
    $region14: #{criterion_forward.5} parent=5 // pred_check_branch
      %160 = sbr.rel (%p158) target = $region16
    $region15: #{criterion_forward.5} parent=5 // pred_region
      // Predicated region
      $region17: #{criterion_forward.5} parent=15 // pred_check
        %p161 = pneg %p52
      $region18: #{criterion_forward.5} parent=15 // pred_check_branch
        %163 = sbr.rel (%p161) target = $region20
      $region19: #{criterion_forward.5} parent=15 // pred_region
        %s164 = sadd.s32 %s17, %s18
        %s165 = smul.u32 2, %s164
        %p166 = scmp.lt.s32.totalorder %s16, 1
        %s167 = scalar_select %p166, %s16, 1
        %p168 = scmp.lt.s32.totalorder %s165, 1
        %s169 = scalar_select %p168, %s165, 1
        %s170 = smul.addr %s167, 2
        %s171 = sadd.s32 %s169, %s170
        %s172 = scalar_lea.vmem %s0, %s171
        %s173 = sadd.s32 %s17, %s18
        %s174 = smul.u32 2, %s173
      $region20: #{criterion_forward.5} parent=15 // pred_fallthru
        _
      // Predicated region
      $region21: #{criterion_forward.5} parent=15 // pred_check
        %p175 = pneg %p82
      $region22: #{criterion_forward.5} parent=15 // pred_check_branch
        %177 = sbr.rel (%p175) target = $region24
      $region23: #{criterion_forward.5} parent=15 // pred_region
        %s178 = sadd.s32 %s17, %s18
        %s179 = smul.u32 2, %s178
        %p180 = scmp.lt.s32.totalorder %s16, 1
        %s181 = scalar_select %p180, %s16, 1
        %p182 = scmp.lt.s32.totalorder %s179, 1
        %s183 = scalar_select %p182, %s179, 1
        %s184 = smul.addr %s181, 2
        %s185 = sadd.s32 %s183, %s184
        %s186 = smul.addr %s185, 4
        %s187 = scalar_lea.vmem %s1, %s186
        %s188 = sadd.s32 %s17, %s18
        %s189 = smul.u32 2, %s188
      $region24: #{criterion_forward.5} parent=15 // pred_fallthru
        _
      // Predicated region
      $region25: #{criterion_forward.5} parent=15 // pred_check
        %p190 = pneg %p108
      $region26: #{criterion_forward.5} parent=15 // pred_check_branch
        %192 = sbr.rel (%p190) target = $region28
      $region27: #{criterion_forward.5} parent=15 // pred_region
        %p193 = scmp.lt.s32.totalorder %s16, 1
        %s194 = scalar_select %p193, %s16, 1
        %s195 = smul.addr %s194, 8
        %s196 = scalar_lea.vmem %s2, %s195
      $region28: #{criterion_forward.5} parent=15 // pred_fallthru
        _
    $region16: #{criterion_forward.5} parent=5 // pred_fallthru
      _
    %p197 = scmp.le.s32.totalorder 1, %s9
    %p198 = scmp.lt.s32.totalorder %s9, 3
    %p199 = pnand %p197, %p198
    %p200 = pneg %p199
    // Predicated region
    $region29: #{criterion_forward.5} parent=5 // pred_check
      _
    $region30: #{criterion_forward.5} parent=5 // pred_check_branch
      %202 = sbr.rel (%p199) target = $region32
    $region31: #{criterion_forward.5} parent=5 // pred_region
      %s203 = ssub.s32 %s9, 1
      %s204 = sadd.s32 %s20, %s21
      %s205 = smul.u32 2, %s204
      %p206 = scmp.lt.s32.totalorder %s19, 1
      %s207 = scalar_select %p206, %s19, 1
      %p208 = scmp.lt.s32.totalorder %s205, 1
      %s209 = scalar_select %p208, %s205, 1
      %s210 = smul.addr %s207, 2
      %s211 = sadd.s32 %s209, %s210
      %s212 = scalar_lea.vmem %s0, %s211
      %p213 = pneg %p58
      %p214 = pneg %p55
      %s215 = sadd.s32 %s20, %s21
      %s216 = smul.u32 2, %s215
      %p217 = scmp.lt.s32.totalorder %s19, 1
      %s218 = scalar_select %p217, %s19, 1
      %p219 = scmp.lt.s32.totalorder %s216, 1
      %s220 = scalar_select %p219, %s216, 1
      %s221 = smul.addr %s218, 2
      %s222 = sadd.s32 %s220, %s221
      %s223 = smul.addr %s222, 4
      %s224 = scalar_lea.vmem %s1, %s223
      %p225 = pneg %p88
      %p226 = pneg %p85
      %p227 = scmp.lt.s32.totalorder %s19, 1
      %s228 = scalar_select %p227, %s19, 1
      %s229 = smul.addr %s228, 8
      %s230 = scalar_lea.vmem %s2, %s229
      %p231 = pneg %p114
      %p232 = pneg %p111
      %p233 = pneg %p142
      %p234 = pneg %p139
      %p235 = scmp.lt.s32.totalorder %s19, 1
      %s236 = scalar_select %p235, %s19, 1
      %p237 = scmp.lt.s32.totalorder %s20, 0
      %s238 = scalar_select %p237, %s20, 0
      %s239 = sadd.s32 %s238, %s236
      %s240 = smul.addr %s239, 8
      %s241 = scalar_lea.vmem %s3, %s240
      %s242 = sadd.s32 %s20, %s21
      %s243 = smul.u32 2, %s242
      %p244 = scmp.lt.s32.totalorder %s19, 1
      %s245 = scalar_select %p244, %s19, 1
      %p246 = scmp.lt.s32.totalorder %s243, 1
      %s247 = scalar_select %p246, %s243, 1
      %s248 = smul.addr %s245, 2
      %s249 = sadd.s32 %s247, %s248
      %s250 = scalar_lea.vmem %s0, %s249
      %s251 = sadd.s32 %s20, %s21
      %s252 = smul.u32 2, %s251
      %s253 = sadd.s32 %s20, %s21
      %s254 = smul.u32 2, %s253
      %p255 = scmp.lt.s32.totalorder %s19, 1
      %s256 = scalar_select %p255, %s19, 1
      %p257 = scmp.lt.s32.totalorder %s254, 1
      %s258 = scalar_select %p257, %s254, 1
      %s259 = smul.addr %s256, 2
      %s260 = sadd.s32 %s258, %s259
      %s261 = smul.addr %s260, 4
      %s262 = scalar_lea.vmem %s1, %s261
      %s263 = sadd.s32 %s20, %s21
      %s264 = smul.u32 2, %s263
      %p265 = scmp.lt.s32.totalorder %s19, 1
      %s266 = scalar_select %p265, %s19, 1
      %s267 = smul.addr %s266, 8
      %s268 = scalar_lea.vmem %s2, %s267
      %p269 = scmp.lt.s32.totalorder %s19, 1
      %s270 = scalar_select %p269, %s19, 1
      %p271 = scmp.lt.s32.totalorder %s20, 0
      %s272 = scalar_select %p271, %s20, 0
      %s273 = sadd.s32 %s272, %s270
      %s274 = smul.addr %s273, 8
      %s275 = scalar_lea.vmem %s3, %s274
      %p276 = scmp.eq.s32.totalorder %s21, 0
      // Predicated region
      $region33: #{criterion_forward.5} parent=31 // pred_check
        %p277 = pneg %p276
      $region34: #{criterion_forward.5} parent=31 // pred_check_branch
        %279 = sbr.rel (%p277) target = $region36
      $region35: #{criterion_forward.5} parent=31 // pred_region
        %vm280 = vcmask 4096
        %281 = vst.msk [vmem:[%s275] sm:$0x1f] %vm280, 0.0
      $region36: #{criterion_forward.5} parent=31 // pred_fallthru
        _
      %v282 = vld [vmem:[%s250] sm:$0x3]
      %v283 = vld [vmem:[%s262] sm:$0xff]
      %v284 = vunpack.c.l.bf16 %v283
      %v285 = vunpack.c.h.bf16 %v283
      %v286 = vld [vmem:[%s268] sm:$0x1f]
      %v287 = vlaneseq
      %v288 = vshrl.u32 %v287, 7
      %v289 = vlaneseq
      %v290 = vshrl.u32 %v289, 7
      %v291 = vsub.s32 0, %v290
      %v292 = vrot.slane %v282, %v291
      %v293 = vlaneseq
      %v294 = vshrl.u32 %v293, 7
      %v295 = vsub.s32 1, %v294
      %v296 = vrot.slane %v282, %v295
      %vm297 = vcmp.eq.s32.totalorder %v288, %v292
      %vm298 = vcmp.eq.s32.totalorder %v288, %v296
      %vm299 = vcmp.ne.s32.totalorder %v282, 255
      %v300 = vsel %vm299, 1, 0
      %v301 = vlaneseq
      %v302 = vshrl.u32 %v301, 7
      %v303 = vsub.s32 0, %v302
      %v304 = vrot.slane %v300, %v303
      %v305 = vlaneseq
      %v306 = vshrl.u32 %v305, 7
      %v307 = vsub.s32 1, %v306
      %v308 = vrot.slane %v300, %v307
      %vm309 = vcmp.eq.s32.totalorder %v304, 1
      %vm310 = vcmp.eq.s32.totalorder %v308, 1
      %vm311 = vmand %vm297, %vm309
      %vm312 = vmand %vm298, %vm310
      %v313 = vsel %vm311, 1.0, 0.0
      %v314 = vsel %vm312, 1.0, 0.0
      %315 = vxpose.xlu0.b32.start [1/16] %v286, 128
      %316 = vxpose.xlu0.b32.cont [2/16] 0.0, 128
      %317 = vxpose.xlu0.b32.cont [3/16] 0.0, 128
      %318 = vxpose.xlu0.b32.cont [4/16] 0.0, 128
      %319 = vxpose.xlu0.b32.cont [5/16] 0.0, 128
      %320 = vxpose.xlu0.b32.cont [6/16] 0.0, 128
      %321 = vxpose.xlu0.b32.cont [7/16] 0.0, 128
      %322 = vxpose.xlu0.b32.cont [8/16] 0.0, 128
      %323 = vxpose.xlu0.b32.cont [9/16] 0.0, 128
      %324 = vxpose.xlu0.b32.cont [10/16] 0.0, 128
      %325 = vxpose.xlu0.b32.cont [11/16] 0.0, 128
      %326 = vxpose.xlu0.b32.cont [12/16] 0.0, 128
      %327 = vxpose.xlu0.b32.cont [13/16] 0.0, 128
      %328 = vxpose.xlu0.b32.cont [14/16] 0.0, 128
      %329 = vxpose.xlu0.b32.cont [15/16] 0.0, 128
      %330 = vxpose.xlu0.b32.end [16/16] 0.0, 128
      %v331 = vpop.trf.xlu0
      %v332 = vpop.trf.xlu0
      %v333 = vpop.trf.xlu0
      %v334 = vpop.trf.xlu0
      %v335 = vpop.trf.xlu0
      %v336 = vpop.trf.xlu0
      %v337 = vpop.trf.xlu0
      %v338 = vpop.trf.xlu0
      %v339 = vpop.trf.xlu0
      %v340 = vpop.trf.xlu0
      %v341 = vpop.trf.xlu0
      %v342 = vpop.trf.xlu0
      %v343 = vpop.trf.xlu0
      %v344 = vpop.trf.xlu0
      %v345 = vpop.trf.xlu0
      %v346 = vpop.trf.xlu0
      %vm347 = vcmask 39936
      %v349 = vsel %vm347, %v331, 0
      %vm351 = vcmask 1044480
      %v353 = vsel %vm351, %v313, 0
      %v356 = vsel %vm351, %v314, 0
      %358 = vmatprep.subr.mxu0 0.0
      %359 = vmatpush1.msra.mxu0 0.0
      %360 = vmatprep.subr.mxu0 0.0
      %361 = vmatpush1.msra.mxu0 0.0
      %362 = vmatprep.subr.mxu0 0.0
      %363 = vmatpush1.msra.mxu0 0.0
      %364 = vmatprep.subr.mxu0 0.0
      %365 = vmatpush1.msra.mxu0 0.0
      %366 = vmatprep.subr.mxu0 0.0
      %367 = vmatpush1.msra.mxu0 0.0
      %368 = vmatprep.subr.mxu0 0.0
      %369 = vmatpush1.msra.mxu0 0.0
      %370 = vmatprep.subr.mxu0 0.0
      %371 = vmatpush1.msra.mxu0 0.0
      %372 = vmatprep.subr.mxu0 0.0
      %373 = vmatpush1.msra.mxu0 0.0
      %374 = vmatprep.subr.mxu0 0.0
      %375 = vmatpush1.msra.mxu0 0.0
      %376 = vmatprep.subr.mxu0 0.0
      %377 = vmatpush1.msra.mxu0 0.0
      %378 = vmatprep.subr.mxu0 0.0
      %379 = vmatpush1.msra.mxu0 0.0
      %380 = vmatprep.subr.mxu0 0.0
      %381 = vmatpush1.msra.mxu0 0.0
      %382 = vmatprep.subr.mxu0 0.0
      %383 = vmatpush1.msra.mxu0 0.0
      %384 = vmatprep.subr.mxu0 0.0
      %385 = vmatpush1.msra.mxu0 0.0
      %386 = vmatprep.subr.mxu0 0.0
      %387 = vmatpush1.msra.mxu0 0.0
      %388 = vmatprep.subr.mxu0 %v356
      %389 = vmatpush1.msra.mxu0 %v353
      %390 = vmatprep.subr.mxu0 0.0
      %391 = vmatpush2.msra.mxu0 0.0
      %392 = vmatprep.subr.mxu0 0.0
      %393 = vmatpush2.msra.mxu0 0.0
      %394 = vmatprep.subr.mxu0 0.0
      %395 = vmatpush2.msra.mxu0 0.0
      %396 = vmatprep.subr.mxu0 0.0
      %397 = vmatpush2.msra.mxu0 0.0
      %398 = vmatprep.subr.mxu0 0.0
      %399 = vmatpush2.msra.mxu0 0.0
      %400 = vmatprep.subr.mxu0 0.0
      %401 = vmatpush2.msra.mxu0 0.0
      %402 = vmatprep.subr.mxu0 0.0
      %403 = vmatpush2.msra.mxu0 0.0
      %404 = vmatprep.subr.mxu0 0.0
      %405 = vmatpush2.msra.mxu0 0.0
      %406 = vmatprep.subr.mxu0 0.0
      %407 = vmatpush2.msra.mxu0 0.0
      %408 = vmatprep.subr.mxu0 0.0
      %409 = vmatpush2.msra.mxu0 0.0
      %410 = vmatprep.subr.mxu0 0.0
      %411 = vmatpush2.msra.mxu0 0.0
      %412 = vmatprep.subr.mxu0 0.0
      %413 = vmatpush2.msra.mxu0 0.0
      %414 = vmatprep.subr.mxu0 0.0
      %415 = vmatpush2.msra.mxu0 0.0
      %416 = vmatprep.subr.mxu0 0.0
      %417 = vmatpush2.msra.mxu0 0.0
      %418 = vmatprep.subr.mxu0 0.0
      %419 = vmatpush2.msra.mxu0 0.0
      %420 = vmatprep.subr.mxu0 0.0
      %421 = vmatpush2.msra.mxu0 0.0
      %422 = vmatprep.mubr.f32.mxu0 0.0
      %423 = vmatmul.mubr.f32.gmra.mxu0 %v349
      %v424 = vpop.f32.mrf.mxu0
      %v425 = vadd.f32 0.0, %v424
      %v426 = vpop.f32.mrf.mxu0
      %v427 = vadd.f32 0.0, %v426
      %428 = vdwg.mxu0
      %v429 = vsub.f32 %v284, %v425
      %v430 = vsub.f32 %v285, %v427
      %v431 = vmul.f32 %v429, %v429
      %v432 = vmul.f32 %v430, %v430
      %v433 = vrot.slane %v431, 4
      %v434 = vadd.f32 %v431, %v433
      %v435 = vrot.slane %v434, 2
      %v436 = vadd.f32 %v434, %v435
      %v437 = vrot.slane %v436, 1
      %v438 = vadd.f32 %v436, %v437
      %v439 = vrot.slane %v432, 4
      %v440 = vadd.f32 %v432, %v439
      %v441 = vrot.slane %v440, 2
      %v442 = vadd.f32 %v440, %v441
      %v443 = vrot.slane %v442, 1
      %v444 = vadd.f32 %v442, %v443
      %v445 = vadd.f32 %v438, 1e-12
      %v446 = vadd.f32 %v444, 1e-12
      %v447 = vrsqrt.pop %v445
      %v448 = vmul.f32 %v445, %v447
      %vm449 = vcmp.eq.f32.partialorder %v445, inf
      %v450 = vsel %vm449, %v445, %v448
      %vm451 = vcmp.eq.f32.partialorder %v445, 0.0
      %v452 = vand.u32 %v445, 2147483648
      %v453 = vsel %vm451, %v452, %v450
      %v454 = vrsqrt.pop %v446
      %v455 = vmul.f32 %v446, %v454
      %vm456 = vcmp.eq.f32.partialorder %v446, inf
      %v457 = vsel %vm456, %v446, %v455
      %vm458 = vcmp.eq.f32.partialorder %v446, 0.0
      %v459 = vand.u32 %v446, 2147483648
      %v460 = vsel %vm458, %v459, %v457
      %v461 = vsub.f32 %v453, 0.5
      %v462 = vsub.f32 %v460, 0.5
      %v463 = vmax.f32 %v461, 0.0
      %v464 = vmax.f32 %v462, 0.0
      %v465 = vmul.f32 %v463, %v463
      %v466 = vmul.f32 %v464, %v464
      %v467 = vld [vmem:[%s275] sm:$0x1f]
      %v468 = vmul.f32 %v313, %v465
      %v469 = vmul.f32 %v314, %v466
      %v470 = vsel %vm351, %v468, 0.0
      %v471 = vsel %vm351, %v469, 0.0
      %v472 = vadd.f32 %v470, %v471
      %473 = vadd.xlane.f32.xlu0 %v472
      %v474 = vpop.xlane.xlu0 %473
      %v475 = vadd.f32 %v467, %v474
      %vm476 = vcmask 4096
      %477 = vst.msk [vmem:[%s275] sm:$0x1f] %vm476, %v475
      %p478 = scmp.lt.s32.totalorder %s19, 1
      %s479 = scalar_select %p478, %s19, 1
      %p480 = scmp.lt.s32.totalorder %s20, 0
      %s481 = scalar_select %p480, %s20, 0
      %s482 = sadd.s32 %s481, %s479
      %s483 = smul.addr %s482, 8
      %s484 = scalar_lea.vmem %s3, %s483
      // Predicated region
      $region37: #{criterion_forward.5} parent=31 // pred_check
        %p485 = pneg %p139
      $region38: #{criterion_forward.5} parent=31 // pred_check_branch
        %487 = sbr.rel (%p485) target = $region40
      $region39: #{criterion_forward.5} parent=31 // pred_region
        _
      $region40: #{criterion_forward.5} parent=31 // pred_fallthru
        _
    $region32: #{criterion_forward.5} parent=5 // pred_fallthru
      _
    %p488 = scmp.le.s32.totalorder 2, %s9
    // Predicated region
    $region41: #{criterion_forward.5} parent=5 // pred_check
      %p489 = pneg %p488
    $region42: #{criterion_forward.5} parent=5 // pred_check_branch
      %491 = sbr.rel (%p489) target = $region44
    $region43: #{criterion_forward.5} parent=5 // pred_region
      %s492 = ssub.s32 %s9, 2
      // Predicated region
      $region45: #{criterion_forward.5} parent=43 // pred_check
        %p493 = pneg %p145
      $region46: #{criterion_forward.5} parent=43 // pred_check_branch
        %495 = sbr.rel (%p493) target = $region48
      $region47: #{criterion_forward.5} parent=43 // pred_region
        %p496 = scmp.lt.s32.totalorder %s22, 1
        %s497 = scalar_select %p496, %s22, 1
        %p498 = scmp.lt.s32.totalorder %s23, 0
        %s499 = scalar_select %p498, %s23, 0
        %s500 = sadd.s32 %s499, %s497
        %s501 = smul.addr %s500, 8
        %s502 = scalar_lea.vmem %s3, %s501
      $region48: #{criterion_forward.5} parent=43 // pred_fallthru
        _
    $region44: #{criterion_forward.5} parent=5 // pred_fallthru
      _
  $region6: #{criterion_forward.5} parent=0 // loop_footer
    %s13 = sadd.s32 1, %s9
  $region7: #{criterion_forward.5} parent=0 // loop_footer_branch
    %8 = sbr.rel target = $region3
  $region8: #{criterion_forward.5} parent=0 // loop_exit
    _

// kernel: criterion_forward.3
$region0: #{criterion_forward.3}
  #allocation0 [shape = 'u32[]', space=smem, size = 0x4, offset = 0x4, fixed_abs, tag = 'smem constant byte address 0x4 - core index']
  #allocation1 [shape = 'u32[144,128]{1,0:T(1,128)}', space=vmem, size = 0x12000, scoped, tag = 'internal scratch']
  %s0 = inlined_call_operand.vmem [shape: s32[2,1,256], index: 0, kind: input, shape index: {}]
  %s1 = inlined_call_operand.vmem [shape: bf16[2,5,256], index: 1, kind: input, shape index: {}]
  %s2 = inlined_call_operand.vmem [shape: f32[2,1,256], index: 2, kind: output, shape index: {0}]
  %s3 = inlined_call_operand.vmem [shape: f32[2,1,256], index: 3, kind: output, shape index: {1}]
  %4 = xla_tuple %s2, %s3
  %s5 = sld [smem:[#allocation0]]
  $region49: #{criterion_forward.3} parent=0
    _
  %s7 = ssub.s32 1, %s5
  %s8 = scalar_select 0, %s7, %s5
  loop: start=0, step=1, limit=4
  $region2: #{criterion_forward.3} parent=0 // loop_pre_header
    _
  $region3: #{criterion_forward.3} parent=0 // loop_header
    %s10 = sphi 0, %s14
    %p11 = scmp.ge.s32.totalorder %s10, 4
    %s17 = sphi 0, %s29
    %s18 = sphi 0, %s25
    %s19 = sphi 0, %s17
    %s20 = sphi 0, %s18
    %s21 = sphi 0, %s19
    %s22 = sphi 0, %s20
    %s34 = sphi 0, %s36
    %s37 = sphi 0, %s34
    %s38 = sphi 0, %s37
    %s54 = sphi 0, %s38
    %s62 = sphi 0, %s64
    %s65 = sphi 0, %s62
    %s66 = sphi 0, %s65
    %s82 = sphi 0, %s66
    %s90 = sphi 0, %s92
    %s93 = sphi 0, %s90
    %s94 = sphi 0, %s93
    %s110 = sphi 0, %s94
    %s118 = sphi 0, %s120
    %s121 = sphi 0, %s118
    %s122 = sphi 0, %s121
    %s138 = sphi 0, %s122
  $region4: #{criterion_forward.3} parent=0 // loop_header_branch
    %13 = sbr.rel (%p11) target = $region8
  $region5: #{criterion_forward.3} parent=0 // loop_body
    %s15 = ssub.s32 %s10, 1
    %s16 = ssub.s32 %s10, 2
    %s23 = sadd.s32 1, %s18
    %p24 = scmp.ge.s32.totalorder %s23, 1
    %s25 = scalar_select %p24, 0, %s23
    %s26 = sadd.s32 1, %s17
    %s27 = scalar_select %p24, %s26, %s17
    %p28 = scmp.ge.s32.totalorder %s27, 2
    %s29 = scalar_select %p28, 0, %s27
    %s30 = ssub.s32 %s17, %s29
    %s31 = ssub.s32 %s18, %s25
    %s32 = sor.u32 %s30, %s31
    %p33 = scmp.eq.s32.totalorder %s32, 0
    %s35 = sadd.s32 %s34, 1
    %s36 = scalar_select %p33, %s34, %s35
    %p39 = pneg %p33
    %p40 = scmp.eq.s32.totalorder %s10, 1
    %p41 = por %p39, %p40
    %p42 = scmp.ne.s32.totalorder %s34, %s37
    %p43 = scmp.eq.s32.totalorder %s10, 0
    %p44 = por %p42, %p43
    %p45 = scmp.ne.s32.totalorder %s34, %s37
    %p46 = scmp.eq.s32.totalorder %s15, 1
    %p47 = por %p45, %p46
    %p48 = scmp.ne.s32.totalorder %s37, %s38
    %p49 = scmp.eq.s32.totalorder %s15, 0
    %p50 = por %p48, %p49
    %p51 = scmp.ne.s32.totalorder %s37, %s38
    %p52 = scmp.eq.s32.totalorder %s16, 1
    %p53 = por %p51, %p52
    %p55 = scmp.ne.s32.totalorder %s38, %s54
    %p56 = scmp.eq.s32.totalorder %s16, 0
    %p57 = por %p55, %p56
    %s58 = ssub.s32 %s17, %s29
    %s59 = ssub.s32 %s18, %s25
    %s60 = sor.u32 %s58, %s59
    %p61 = scmp.eq.s32.totalorder %s60, 0
    %s63 = sadd.s32 %s62, 1
    %s64 = scalar_select %p61, %s62, %s63
    %p67 = pneg %p61
    %p68 = scmp.eq.s32.totalorder %s10, 1
    %p69 = por %p67, %p68
    %p70 = scmp.ne.s32.totalorder %s62, %s65
    %p71 = scmp.eq.s32.totalorder %s10, 0
    %p72 = por %p70, %p71
    %p73 = scmp.ne.s32.totalorder %s62, %s65
    %p74 = scmp.eq.s32.totalorder %s15, 1
    %p75 = por %p73, %p74
    %p76 = scmp.ne.s32.totalorder %s65, %s66
    %p77 = scmp.eq.s32.totalorder %s15, 0
    %p78 = por %p76, %p77
    %p79 = scmp.ne.s32.totalorder %s65, %s66
    %p80 = scmp.eq.s32.totalorder %s16, 1
    %p81 = por %p79, %p80
    %p83 = scmp.ne.s32.totalorder %s66, %s82
    %p84 = scmp.eq.s32.totalorder %s16, 0
    %p85 = por %p83, %p84
    %s86 = ssub.s32 %s17, %s29
    %s87 = ssub.s32 %s18, %s25
    %s88 = sor.u32 %s86, %s87
    %p89 = scmp.eq.s32.totalorder %s88, 0
    %s91 = sadd.s32 %s90, 1
    %s92 = scalar_select %p89, %s90, %s91
    %p95 = pneg %p89
    %p96 = scmp.eq.s32.totalorder %s10, 1
    %p97 = por %p95, %p96
    %p98 = scmp.ne.s32.totalorder %s90, %s93
    %p99 = scmp.eq.s32.totalorder %s10, 0
    %p100 = por %p98, %p99
    %p101 = scmp.ne.s32.totalorder %s90, %s93
    %p102 = scmp.eq.s32.totalorder %s15, 1
    %p103 = por %p101, %p102
    %p104 = scmp.ne.s32.totalorder %s93, %s94
    %p105 = scmp.eq.s32.totalorder %s15, 0
    %p106 = por %p104, %p105
    %p107 = scmp.ne.s32.totalorder %s93, %s94
    %p108 = scmp.eq.s32.totalorder %s16, 1
    %p109 = por %p107, %p108
    %p111 = scmp.ne.s32.totalorder %s94, %s110
    %p112 = scmp.eq.s32.totalorder %s16, 0
    %p113 = por %p111, %p112
    %s114 = ssub.s32 %s17, %s29
    %s115 = ssub.s32 %s18, %s25
    %s116 = sor.u32 %s114, %s115
    %p117 = scmp.eq.s32.totalorder %s116, 0
    %s119 = sadd.s32 %s118, 1
    %s120 = scalar_select %p117, %s118, %s119
    %p123 = pneg %p117
    %p124 = scmp.eq.s32.totalorder %s10, 1
    %p125 = por %p123, %p124
    %p126 = scmp.ne.s32.totalorder %s118, %s121
    %p127 = scmp.eq.s32.totalorder %s10, 0
    %p128 = por %p126, %p127
    %p129 = scmp.ne.s32.totalorder %s118, %s121
    %p130 = scmp.eq.s32.totalorder %s15, 1
    %p131 = por %p129, %p130
    %p132 = scmp.ne.s32.totalorder %s121, %s122
    %p133 = scmp.eq.s32.totalorder %s15, 0
    %p134 = por %p132, %p133
    %p135 = scmp.ne.s32.totalorder %s121, %s122
    %p136 = scmp.eq.s32.totalorder %s16, 1
    %p137 = por %p135, %p136
    %p139 = scmp.ne.s32.totalorder %s122, %s138
    %p140 = scmp.eq.s32.totalorder %s16, 0
    %p141 = por %p139, %p140
    %p142 = scmp.le.s32.totalorder 1, %s10
    %p143 = scmp.lt.s32.totalorder %s10, 3
    %p144 = pnand %p142, %p143
    %p145 = pneg %p144
    // Predicated region
    $region9: #{criterion_forward.3} parent=5 // pred_check
      _
    $region10: #{criterion_forward.3} parent=5 // pred_check_branch
      %147 = sbr.rel (%p144) target = $region12
    $region11: #{criterion_forward.3} parent=5 // pred_region
      %s148 = ssub.s32 %s10, 1
    $region12: #{criterion_forward.3} parent=5 // pred_fallthru
      _
    %p149 = scmp.lt.s32.totalorder %s10, 2
    // Predicated region
    $region13: #{criterion_forward.3} parent=5 // pred_check
      %p150 = pneg %p149
    $region14: #{criterion_forward.3} parent=5 // pred_check_branch
      %152 = sbr.rel (%p150) target = $region16
    $region15: #{criterion_forward.3} parent=5 // pred_region
      // Predicated region
      $region17: #{criterion_forward.3} parent=15 // pred_check
        %p153 = pneg %p44
      $region18: #{criterion_forward.3} parent=15 // pred_check_branch
        %155 = sbr.rel (%p153) target = $region20
      $region19: #{criterion_forward.3} parent=15 // pred_region
        %s156 = smul.u32 2, %s18
        %p157 = scmp.lt.s32.totalorder %s17, 1
        %s158 = scalar_select %p157, %s17, 1
        %p159 = scmp.lt.s32.totalorder %s156, 1
        %s160 = scalar_select %p159, %s156, 1
        %s161 = smul.addr %s158, 2
        %s162 = sadd.s32 %s160, %s161
        %s163 = scalar_lea.vmem %s0, %s162
        %s164 = smul.u32 2, %s18
      $region20: #{criterion_forward.3} parent=15 // pred_fallthru
        _
      // Predicated region
      $region21: #{criterion_forward.3} parent=15 // pred_check
        %p165 = pneg %p72
      $region22: #{criterion_forward.3} parent=15 // pred_check_branch
        %167 = sbr.rel (%p165) target = $region24
      $region23: #{criterion_forward.3} parent=15 // pred_region
        %s168 = smul.u32 2, %s18
        %p169 = scmp.lt.s32.totalorder %s17, 1
        %s170 = scalar_select %p169, %s17, 1
        %p171 = scmp.lt.s32.totalorder %s168, 1
        %s172 = scalar_select %p171, %s168, 1
        %s173 = smul.addr %s170, 2
        %s174 = sadd.s32 %s172, %s173
        %s175 = smul.addr %s174, 4
        %s176 = scalar_lea.vmem %s1, %s175
        %s177 = smul.u32 2, %s18
      $region24: #{criterion_forward.3} parent=15 // pred_fallthru
        _
    $region16: #{criterion_forward.3} parent=5 // pred_fallthru
      _
    %p178 = scmp.le.s32.totalorder 1, %s10
    %p179 = scmp.lt.s32.totalorder %s10, 3
    %p180 = pnand %p178, %p179
    %p181 = pneg %p180
    // Predicated region
    $region25: #{criterion_forward.3} parent=5 // pred_check
      _
    $region26: #{criterion_forward.3} parent=5 // pred_check_branch
      %183 = sbr.rel (%p180) target = $region28
    $region27: #{criterion_forward.3} parent=5 // pred_region
      %s184 = ssub.s32 %s10, 1
      %s185 = smul.u32 2, %s20
      %p186 = scmp.lt.s32.totalorder %s19, 1
      %s187 = scalar_select %p186, %s19, 1
      %p188 = scmp.lt.s32.totalorder %s185, 1
      %s189 = scalar_select %p188, %s185, 1
      %s190 = smul.addr %s187, 2
      %s191 = sadd.s32 %s189, %s190
      %s192 = scalar_lea.vmem %s0, %s191
      %p193 = pneg %p50
      %p194 = pneg %p47
      %s195 = smul.u32 2, %s20
      %p196 = scmp.lt.s32.totalorder %s19, 1
      %s197 = scalar_select %p196, %s19, 1
      %p198 = scmp.lt.s32.totalorder %s195, 1
      %s199 = scalar_select %p198, %s195, 1
      %s200 = smul.addr %s197, 2
      %s201 = sadd.s32 %s199, %s200
      %s202 = smul.addr %s201, 4
      %s203 = scalar_lea.vmem %s1, %s202
      %p204 = pneg %p78
      %p205 = pneg %p75
      %p206 = pneg %p106
      %p207 = pneg %p103
      %s208 = smul.u32 2, %s20
      %p209 = scmp.lt.s32.totalorder %s19, 1
      %s210 = scalar_select %p209, %s19, 1
      %p211 = scmp.lt.s32.totalorder %s208, 1
      %s212 = scalar_select %p211, %s208, 1
      %s213 = smul.addr %s210, 2
      %s214 = sadd.s32 %s212, %s213
      %s215 = scalar_lea.vmem %s2, %s214
      %p216 = pneg %p134
      %p217 = pneg %p131
      %s218 = smul.u32 2, %s20
      %p219 = scmp.lt.s32.totalorder %s19, 1
      %s220 = scalar_select %p219, %s19, 1
      %p221 = scmp.lt.s32.totalorder %s218, 1
      %s222 = scalar_select %p221, %s218, 1
      %s223 = smul.addr %s220, 2
      %s224 = sadd.s32 %s222, %s223
      %s225 = scalar_lea.vmem %s3, %s224
      %s226 = smul.u32 2, %s20
      %p227 = scmp.lt.s32.totalorder %s19, 1
      %s228 = scalar_select %p227, %s19, 1
      %p229 = scmp.lt.s32.totalorder %s226, 1
      %s230 = scalar_select %p229, %s226, 1
      %s231 = smul.addr %s228, 2
      %s232 = sadd.s32 %s230, %s231
      %s233 = scalar_lea.vmem %s0, %s232
      %s234 = smul.u32 2, %s20
      %s235 = smul.u32 2, %s20
      %p236 = scmp.lt.s32.totalorder %s19, 1
      %s237 = scalar_select %p236, %s19, 1
      %p238 = scmp.lt.s32.totalorder %s235, 1
      %s239 = scalar_select %p238, %s235, 1
      %s240 = smul.addr %s237, 2
      %s241 = sadd.s32 %s239, %s240
      %s242 = smul.addr %s241, 4
      %s243 = scalar_lea.vmem %s1, %s242
      %s244 = smul.u32 2, %s20
      %s245 = smul.u32 2, %s20
      %p246 = scmp.lt.s32.totalorder %s19, 1
      %s247 = scalar_select %p246, %s19, 1
      %p248 = scmp.lt.s32.totalorder %s245, 1
      %s249 = scalar_select %p248, %s245, 1
      %s250 = smul.addr %s247, 2
      %s251 = sadd.s32 %s249, %s250
      %s252 = scalar_lea.vmem %s2, %s251
      %s253 = smul.u32 2, %s20
      %s254 = smul.u32 2, %s20
      %p255 = scmp.lt.s32.totalorder %s19, 1
      %s256 = scalar_select %p255, %s19, 1
      %p257 = scmp.lt.s32.totalorder %s254, 1
      %s258 = scalar_select %p257, %s254, 1
      %s259 = smul.addr %s256, 2
      %s260 = sadd.s32 %s258, %s259
      %s261 = scalar_lea.vmem %s3, %s260
      %s262 = smul.u32 2, %s20
      %v263 = vld [vmem:[%s243] sm:$0x77]
      %v264 = vunpack.c.l.bf16 %v263
      %v265 = vunpack.c.h.bf16 %v263
      %v266 = vld [vmem:[%s233] sm:$0x3]
      %v267 = vlaneseq
      %v268 = vshrl.u32 %v267, 7
      %v269 = vlaneseq
      %v270 = vshrl.u32 %v269, 7
      %v271 = vsub.s32 0, %v270
      %v272 = vrot.slane %v266, %v271
      %v273 = vlaneseq
      %v274 = vshrl.u32 %v273, 7
      %v275 = vsub.s32 1, %v274
      %v276 = vrot.slane %v266, %v275
      %vm277 = vcmp.eq.s32.totalorder %v268, %v272
      %vm278 = vcmp.eq.s32.totalorder %v268, %v276
      %vm279 = vcmp.ne.s32.totalorder %v266, 255
      %v280 = vsel %vm279, 1, 0
      %v281 = vlaneseq
      %v282 = vshrl.u32 %v281, 7
      %v283 = vsub.s32 0, %v282
      %v284 = vrot.slane %v280, %v283
      %v285 = vlaneseq
      %v286 = vshrl.u32 %v285, 7
      %v287 = vsub.s32 1, %v286
      %v288 = vrot.slane %v280, %v287
      %vm289 = vcmp.eq.s32.totalorder %v284, 1
      %vm290 = vcmp.eq.s32.totalorder %v288, 1
      %vm291 = vmand %vm277, %vm289
      %vm292 = vmand %vm278, %vm290
      %v293 = vsel %vm291, 1.0, 0.0
      %v294 = vsel %vm292, 1.0, 0.0
      %vm295 = vcmask 1044480
      %v296 = vsel %vm295, %v264, -inf
      %v297 = vrot.slane %v296, 4
      %v298 = vmax.f32 %v296, %v297
      %v299 = vrot.slane %v298, 2
      %v300 = vmax.f32 %v298, %v299
      %v301 = vrot.slane %v300, 1
      %v302 = vmax.f32 %v300, %v301
      %v303 = vsel %vm295, %v265, -inf
      %v304 = vrot.slane %v303, 4
      %v305 = vmax.f32 %v303, %v304
      %v306 = vrot.slane %v305, 2
      %v307 = vmax.f32 %v305, %v306
      %v308 = vrot.slane %v307, 1
      %v309 = vmax.f32 %v307, %v308
      %v310 = vsub.f32 %v264, %v302
      %v311 = vsub.f32 %v265, %v309
      %v312 = vmul.f32 %v310, 1.442695
      %v313 = vpow.pop %v312
      %v314 = vmul.f32 %v311, 1.442695
      %v315 = vpow.pop %v314
      %v316 = vsel %vm295, %v313, 0.0
      %v317 = vrot.slane %v316, 4
      %v318 = vadd.f32 %v316, %v317
      %v319 = vrot.slane %v318, 2
      %v320 = vadd.f32 %v318, %v319
      %v321 = vrot.slane %v320, 1
      %v322 = vadd.f32 %v320, %v321
      %v323 = vsel %vm295, %v315, 0.0
      %v324 = vrot.slane %v323, 4
      %v325 = vadd.f32 %v323, %v324
      %v326 = vrot.slane %v325, 2
      %v327 = vadd.f32 %v325, %v326
      %v328 = vrot.slane %v327, 1
      %v329 = vadd.f32 %v327, %v328
      %v330 = vlog2.pop %v322
      %v331 = vmul.f32 %v330, 0.6931472
      %v332 = vlog2.pop %v329
      %v333 = vmul.f32 %v332, 0.6931472
      %v334 = vsub.f32 %v310, %v331
      %v335 = vsub.f32 %v311, %v333
      %v336 = vmul.f32 %v334, %v293
      %v337 = vmul.f32 %v335, %v294
      %v338 = vsel %vm295, %v336, 0.0
      %v339 = vrot.slane %v338, 4
      %v340 = vadd.f32 %v338, %v339
      %v341 = vrot.slane %v340, 2
      %v342 = vadd.f32 %v340, %v341
      %v343 = vrot.slane %v342, 1
      %v344 = vadd.f32 %v342, %v343
      %v345 = vsel %vm295, %v337, 0.0
      %v346 = vrot.slane %v345, 4
      %v347 = vadd.f32 %v345, %v346
      %v348 = vrot.slane %v347, 2
      %v349 = vadd.f32 %v347, %v348
      %v350 = vrot.slane %v349, 1
      %v351 = vadd.f32 %v349, %v350
      %v352 = vsub.f32 0.0, %v344
      %v353 = vsub.f32 0.0, %v351
      %v356 = vcombine.low %v352, %v353
      %v358 = vunpack.c.l.s4 1966171168
      %v359 = vunpack.c.0.s8 %v358
      %v360 = vlaneseq
      %v361 = vshrl.u32 %v360, 7
      %v362 = vsub.s32 %v359, %v361
      %v363 = vrot.slane %v356, %v362
      %v365 = vunpack.c.l.s4 1966171168
      %v366 = vunpack.c.0.s8 %v365
      %v367 = vlaneseq
      %v368 = vshrl.u32 %v367, 7
      %v369 = vsub.s32 %v366, %v368
      %v370 = vrot.slane %v363, %v369
      %v372 = vlaneseq
      %vm373 = vcmp.ge.s32.totalorder %v372, 0
      %vm374 = vcmp.lt.s32.totalorder %v372, 256
      %vm375 = vmand %vm373, %vm374
      %376 = vst.msk [vmem:[%s252] sm:$0x3] %vm375, %v370
      %v377 = vmul.f32 %v344, 1.442695
      %v378 = vpow.pop %v377
      %v379 = vmul.f32 %v351, 1.442695
      %v380 = vpow.pop %v379
      %v383 = vcombine.low %v378, %v380
      %v385 = vunpack.c.l.s4 1966171168
      %v386 = vunpack.c.0.s8 %v385
      %v387 = vlaneseq
      %v388 = vshrl.u32 %v387, 7
      %v389 = vsub.s32 %v386, %v388
      %v390 = vrot.slane %v383, %v389
      %v392 = vunpack.c.l.s4 1966171168
      %v393 = vunpack.c.0.s8 %v392
      %v394 = vlaneseq
      %v395 = vshrl.u32 %v394, 7
      %v396 = vsub.s32 %v393, %v395
      %v397 = vrot.slane %v390, %v396
      %399 = vst.msk [vmem:[%s261] sm:$0x3] %vm375, %v397
      %s400 = smul.u32 2, %s20
      %p401 = scmp.lt.s32.totalorder %s19, 1
      %s402 = scalar_select %p401, %s19, 1
      %p403 = scmp.lt.s32.totalorder %s400, 1
      %s404 = scalar_select %p403, %s400, 1
      %s405 = smul.addr %s402, 2
      %s406 = sadd.s32 %s404, %s405
      %s407 = scalar_lea.vmem %s2, %s406
      %s408 = smul.u32 2, %s20
      %p409 = scmp.lt.s32.totalorder %s19, 1
      %s410 = scalar_select %p409, %s19, 1
      %p411 = scmp.lt.s32.totalorder %s408, 1
      %s412 = scalar_select %p411, %s408, 1
      %s413 = smul.addr %s410, 2
      %s414 = sadd.s32 %s412, %s413
      %s415 = scalar_lea.vmem %s3, %s414
      // Predicated region
      $region29: #{criterion_forward.3} parent=27 // pred_check
        %p416 = pneg %p103
      $region30: #{criterion_forward.3} parent=27 // pred_check_branch
        %418 = sbr.rel (%p416) target = $region32
      $region31: #{criterion_forward.3} parent=27 // pred_region
        %s419 = smul.u32 2, %s20
      $region32: #{criterion_forward.3} parent=27 // pred_fallthru
        _
      // Predicated region
      $region33: #{criterion_forward.3} parent=27 // pred_check
        %p420 = pneg %p131
      $region34: #{criterion_forward.3} parent=27 // pred_check_branch
        %422 = sbr.rel (%p420) target = $region36
      $region35: #{criterion_forward.3} parent=27 // pred_region
        %s423 = smul.u32 2, %s20
      $region36: #{criterion_forward.3} parent=27 // pred_fallthru
        _
    $region28: #{criterion_forward.3} parent=5 // pred_fallthru
      _
    %p424 = scmp.le.s32.totalorder 2, %s10
    // Predicated region
    $region37: #{criterion_forward.3} parent=5 // pred_check
      %p425 = pneg %p424
    $region38: #{criterion_forward.3} parent=5 // pred_check_branch
      %427 = sbr.rel (%p425) target = $region40
    $region39: #{criterion_forward.3} parent=5 // pred_region
      %s428 = ssub.s32 %s10, 2
      // Predicated region
      $region41: #{criterion_forward.3} parent=39 // pred_check
        %p429 = pneg %p109
      $region42: #{criterion_forward.3} parent=39 // pred_check_branch
        %431 = sbr.rel (%p429) target = $region44
      $region43: #{criterion_forward.3} parent=39 // pred_region
        %s432 = smul.u32 2, %s22
        %p433 = scmp.lt.s32.totalorder %s21, 1
        %s434 = scalar_select %p433, %s21, 1
        %p435 = scmp.lt.s32.totalorder %s432, 1
        %s436 = scalar_select %p435, %s432, 1
        %s437 = smul.addr %s434, 2
        %s438 = sadd.s32 %s436, %s437
        %s439 = scalar_lea.vmem %s2, %s438
      $region44: #{criterion_forward.3} parent=39 // pred_fallthru
        _
      // Predicated region
      $region45: #{criterion_forward.3} parent=39 // pred_check
        %p440 = pneg %p137
      $region46: #{criterion_forward.3} parent=39 // pred_check_branch
        %442 = sbr.rel (%p440) target = $region48
      $region47: #{criterion_forward.3} parent=39 // pred_region
        %s443 = smul.u32 2, %s22
        %p444 = scmp.lt.s32.totalorder %s21, 1
        %s445 = scalar_select %p444, %s21, 1
        %p446 = scmp.lt.s32.totalorder %s443, 1
        %s447 = scalar_select %p446, %s443, 1
        %s448 = smul.addr %s445, 2
        %s449 = sadd.s32 %s447, %s448
        %s450 = scalar_lea.vmem %s3, %s449
      $region48: #{criterion_forward.3} parent=39 // pred_fallthru
        _
    $region40: #{criterion_forward.3} parent=5 // pred_fallthru
      _
  $region6: #{criterion_forward.3} parent=0 // loop_footer
    %s14 = sadd.s32 1, %s10
  $region7: #{criterion_forward.3} parent=0 // loop_footer_branch
    %9 = sbr.rel target = $region3
  $region8: #{criterion_forward.3} parent=0 // loop_exit
    _

</llo_original>
